<compile_context>
chip_gen: v5e
topology: v5e:2x2
jax: 0.10.0
libtpu: 0.0.40
codegen_flags: <defaults>
</compile_context>

<pallas_src>
import math

import jax
import jax.numpy as jnp
from jax.experimental import pallas as pl
from jax.experimental.pallas import tpu as pltpu


_NEG = -1e30  # effectively -inf for padded action-logit columns (keep in f32)


def _round_up(x, m):
    return (x + m - 1) // m * m


def _policy_kernel(x_ref, h0_ref,
                   w1_ref, b1_ref, w2_ref, b2_ref,
                   wih_ref, bih_ref, whh_ref, bhh_ref,
                   whead_ref, bhead_ref,
                   logits_ref, lse_ref, body_ref, hout_ref,
                   xg_ref):
    T = x_ref.shape[1]            # static time extent
    BT = x_ref.shape[2]           # batch-tile rows (sublane aligned)
    Hp = h0_ref.shape[2]          # padded hidden width (lane aligned, 128)
    D = x_ref.shape[3]
    Ap = logits_ref.shape[3]

    # ---- MLP trunk: batch*time folded into the matmul M dim, bf16 on MXU ----
    x = x_ref[0].reshape(T * BT, D).astype(jnp.bfloat16)
    f = jnp.tanh(jnp.dot(x, w1_ref[...],
                         preferred_element_type=jnp.float32) + b1_ref[...])
    f = jnp.tanh(jnp.dot(f.astype(jnp.bfloat16), w2_ref[...],
                         preferred_element_type=jnp.float32) + b2_ref[...])

    # Input contribution to all 3 GRU gates for every (t, b) row, gate order
    # (r, z, n), each gate in its own 128-lane-aligned chunk.  Written to a
    # VMEM scratch so the unrolled time loop only keeps one timestep live.
    xg = jnp.dot(f.astype(jnp.bfloat16), wih_ref[...],
                 preferred_element_type=jnp.float32) + bih_ref[...]
    xg_ref[...] = xg.reshape(T, BT, 3 * Hp)

    # Loop-invariant recurrent weights: load once, outside the time loop.
    whh = whh_ref[...]            # (Hp, 3*Hp) bf16
    bhh = bhh_ref[...]            # (1, 3*Hp)  f32

    # ---- GRU recurrence over time (static unroll; per-step live range is one
    #      timestep of xg plus h).  Gate math stays f32; the sigmoid/tanh EUP
    #      work is the architectural floor of this serial path. ----
    h = h0_ref[0]                 # (BT, Hp) f32
    for t in range(T):
        xg_t = xg_ref[t]                                              # (BT, 3*Hp)
        hg = jnp.dot(h.astype(jnp.bfloat16), whh,
                     preferred_element_type=jnp.float32) + bhh        # (BT, 3*Hp)
        r = jax.nn.sigmoid(xg_t[:, 0:Hp] + hg[:, 0:Hp])
        z = jax.nn.sigmoid(xg_t[:, Hp:2 * Hp] + hg[:, Hp:2 * Hp])
        n = jnp.tanh(xg_t[:, 2 * Hp:3 * Hp] + r * hg[:, 2 * Hp:3 * Hp])
        h = (1.0 - z) * n + z * h
        body_ref[0, t, :, :] = h          # aligned full-tile store of h_t

    hout_ref[0] = h

    # ---- categorical head: raw logits + per-row logsumexp (what
    #      Categorical(logits=pi) needs); log-probs formed outside. ----
    body = body_ref[0].reshape(T * BT, Hp)
    logits = jnp.dot(body.astype(jnp.bfloat16), whead_ref[...],
                     preferred_element_type=jnp.float32) + bhead_ref[...]
    m = jnp.max(logits, axis=-1, keepdims=True)
    lse = m + jnp.log(jnp.sum(jnp.exp(logits - m), axis=-1, keepdims=True))
    logits_ref[0] = logits.reshape(T, BT, Ap)
    lse_ref[0] = lse.reshape(T, BT, 1)


def _pad2(a, rows, cols, fill=0.0):
    r, c = a.shape
    return jnp.pad(a, ((0, rows - r), (0, cols - c)), constant_values=fill)


def _pad_gates(w, hp, row_pad_to=None):
    """Pad concatenated (r,z,n) gate weights (K, 3H) -> (rows, 3*hp) per-gate."""
    h = w.shape[-1] // 3
    rows = w.shape[0] if row_pad_to is None else row_pad_to
    parts = [_pad2(w[:, i * h:(i + 1) * h], rows, hp) for i in range(3)]
    return jnp.concatenate(parts, axis=-1)


def _batch_tiling(B):
    """Choose (BT, Bp, NB): big tiles for MXU occupancy on the serial GRU path,
    >= 2 tiles only when both halves still have >= 128 rows (v7x megacore);
    on single-TC chips extra grid steps are pure overhead."""
    Bp = _round_up(B, 8)
    if Bp >= 512:
        BT = 256
    elif Bp >= 256:
        BT = _round_up(Bp // 2, 8)
    else:
        BT = Bp
    Bp = _round_up(Bp, BT)
    return BT, Bp, Bp // BT


@jax.jit
def rnn_categorical_policy_forward(x, hidden_state, params):
    """x: (B, T, D), hidden_state: (1, B, H).  Returns (logits, log_probs), body_x, hidden."""
    B, T, D = x.shape
    H = params["w2"].shape[0]
    A = params["w_head"].shape[1]

    BT, Bp, NB = _batch_tiling(B)
    Hp = _round_up(H, 128)              # lane-dense hidden / gate chunks
    Ap = _round_up(A, 128)              # lane-dense logits

    # ---- pad & re-layout parameters; matmul operands in bf16 (f32 biases,
    #      f32 accumulation).  Zero padding keeps the math exact; padded action
    #      columns get a -1e30 f32 bias so they vanish from the logsumexp. ----
    cdt = jnp.bfloat16
    w1 = _pad2(params["w1"], D, Hp).astype(cdt)
    b1 = _pad2(params["b1"], 1, Hp)
    w2 = _pad2(params["w2"], Hp, Hp).astype(cdt)
    b2 = _pad2(params["b2"], 1, Hp)
    wih = _pad_gates(params["w_ih"], Hp, row_pad_to=Hp).astype(cdt)
    bih = _pad_gates(params["b_ih"], Hp)
    whh = _pad_gates(params["w_hh"], Hp, row_pad_to=Hp).astype(cdt)
    bhh = _pad_gates(params["b_hh"], Hp)
    whead = _pad2(params["w_head"], Hp, Ap).astype(cdt)
    bhead = _pad2(params["b_head"], 1, Ap, fill=_NEG)

    # ---- time-major, batch-tiled input layout: (NB, T, BT, D) ----
    xp = jnp.pad(x, ((0, Bp - B), (0, 0), (0, 0)))
    xp = xp.reshape(NB, BT, T, D).transpose(0, 2, 1, 3)

    h0 = _pad2(hidden_state[0], Bp, Hp).reshape(NB, BT, Hp)

    wspec = lambda a: pl.BlockSpec(a.shape, lambda nb: (0, 0))
    in_specs = [
        pl.BlockSpec((1, T, BT, D), lambda nb: (nb, 0, 0, 0)),          # x
        pl.BlockSpec((1, BT, Hp), lambda nb: (nb, 0, 0)),               # h0
        wspec(w1), wspec(b1), wspec(w2), wspec(b2),
        wspec(wih), wspec(bih), wspec(whh), wspec(bhh),
        wspec(whead), wspec(bhead),
    ]
    out_specs = (
        pl.BlockSpec((1, T, BT, Ap), lambda nb: (nb, 0, 0, 0)),         # logits
        pl.BlockSpec((1, T, BT, 1), lambda nb: (nb, 0, 0, 0)),          # logsumexp
        pl.BlockSpec((1, T, BT, Hp), lambda nb: (nb, 0, 0, 0)),         # body_x
        pl.BlockSpec((1, BT, Hp), lambda nb: (nb, 0, 0)),               # hidden out
    )
    out_shape = (
        jax.ShapeDtypeStruct((NB, T, BT, Ap), jnp.float32),
        jax.ShapeDtypeStruct((NB, T, BT, 1), jnp.float32),
        jax.ShapeDtypeStruct((NB, T, BT, Hp), jnp.float32),
        jax.ShapeDtypeStruct((NB, BT, Hp), jnp.float32),
    )
    scratch_shapes = [pltpu.VMEM((T, BT, 3 * Hp), jnp.float32)]         # GRU input gates

    # ---- explicit VMEM budget: double-buffered blocks + scratch + headroom ----
    f32b = 4
    blk_in = (T * BT * D + BT * Hp) * f32b
    blk_w = sum(int(w.size) * w.dtype.itemsize
                for w in (w1, b1, w2, b2, wih, bih, whh, bhh, whead, bhead))
    blk_out = (T * BT * (Ap + 1 + Hp) + BT * Hp) * f32b
    scratch_b = T * BT * 3 * Hp * f32b
    vmem_bytes = 2 * (blk_in + blk_w + blk_out) + scratch_b + (8 << 20)
    vmem_bytes = int(min(max(vmem_bytes, 32 << 20), 64 << 20))

    logits_k, lse_k, body_k, hout_k = pl.pallas_call(
        _policy_kernel,
        out_shape=out_shape,
        grid=(NB,),
        in_specs=in_specs,
        out_specs=out_specs,
        scratch_shapes=scratch_shapes,
        compiler_params=pltpu.CompilerParams(
            dimension_semantics=("parallel",),      # independent batch tiles
            vmem_limit_bytes=vmem_bytes),
    )(xp, h0, w1, b1, w2, b2, wih, bih, whh, bhh, whead, bhead)

    def untile(y, c):
        # (NB, T, BT, cp) -> (B, T, c)
        nb_, t_, bt_, cp = y.shape
        y = y.transpose(0, 2, 1, 3).reshape(nb_ * bt_, t_, cp)
        return y[:B, :, :c]

    logits = untile(logits_k, A)
    lse = untile(lse_k, 1)
    logp = logits - lse                          # normalized log-probs, outside the kernel
    body_x = untile(body_k, H)
    hidden_out = hout_k.reshape(Bp, Hp)[:B, :H][None]                   # (1, B, H)

    # TODO(synk): torch.distributions.Categorical itself has no Pallas
    # equivalent; (logits, log_probs) fully determine it.
    return (logits, logp), body_x, hidden_out


def _reference_forward(x, hidden_state, p):
    """Pure-JAX f32 reference for the same math (correctness check)."""
    f = jnp.tanh(x @ p["w1"] + p["b1"][0])
    f = jnp.tanh(f @ p["w2"] + p["b2"][0])
    h = hidden_state[0]                                                 # (B, H)
    H = h.shape[-1]
    hs = []
    for t in range(x.shape[1]):
        xg = f[:, t] @ p["w_ih"] + p["b_ih"][0]
        hg = h @ p["w_hh"] + p["b_hh"][0]
        r = jax.nn.sigmoid(xg[:, :H] + hg[:, :H])
        z = jax.nn.sigmoid(xg[:, H:2 * H] + hg[:, H:2 * H])
        n = jnp.tanh(xg[:, 2 * H:] + r * hg[:, 2 * H:])
        h = (1.0 - z) * n + z * h
        hs.append(h)
    body = jnp.stack(hs, axis=1)
    logits = body @ p["w_head"] + p["b_head"][0]
    logp = jax.nn.log_softmax(logits, axis=-1)
    return logits, logp, body, h[None]


def _init_params(key, d_in, hidden, action_dim):
    ks = jax.random.split(key, 12)
    s = 0.1
    return {
        "w1": s * jax.random.normal(ks[0], (d_in, hidden), jnp.float32),
        "b1": s * jax.random.normal(ks[1], (1, hidden), jnp.float32),
        "w2": s * jax.random.normal(ks[2], (hidden, hidden), jnp.float32),
        "b2": s * jax.random.normal(ks[3], (1, hidden), jnp.float32),
        "w_ih": s * jax.random.normal(ks[4], (hidden, 3 * hidden), jnp.float32),
        "b_ih": s * jax.random.normal(ks[5], (1, 3 * hidden), jnp.float32),
        "w_hh": s * jax.random.normal(ks[6], (hidden, 3 * hidden), jnp.float32),
        "b_hh": s * jax.random.normal(ks[7], (1, 3 * hidden), jnp.float32),
        "w_head": s * jax.random.normal(ks[8], (hidden, action_dim), jnp.float32),
        "b_head": s * jax.random.normal(ks[9], (1, action_dim), jnp.float32),
    }


if __name__ == "__main__":
    B, T, D, H, A = 2, 8, 16, 32, 6

    key = jax.random.PRNGKey(0)
    k_x, k_h, k_p = jax.random.split(key, 3)
    x = jax.random.normal(k_x, (B, T, D), jnp.float32)
    hidden_state = jax.random.normal(k_h, (1, B, H), jnp.float32)       # (num_layers, B, H)
    params = _init_params(k_p, D, H, A)

    (logits, logp), body_x, h_out = jax.block_until_ready(
        rnn_categorical_policy_forward(x, hidden_state, params))

    r_logits, r_logp, r_body, r_h = _reference_forward(x, hidden_state, params)
    # Tolerances loosened vs. the f32 reference because matmul operands now run
    # in bf16 on the MXU (f32 accumulation).
    tol = dict(atol=5e-2, rtol=5e-2)
    assert jnp.allclose(logits, r_logits, **tol)
    assert jnp.allclose(logp, r_logp, **tol)
    assert jnp.allclose(body_x, r_body, **tol)
    assert jnp.allclose(h_out, r_h, **tol)
    # dtype-independent self-consistency: log-probs exponentiate to a distribution
    assert jnp.allclose(jnp.sum(jnp.exp(logp), axis=-1), 1.0, atol=1e-3)

    print("KERNEL_OK")
</pallas_src>

<mosaic_0001>
module attributes {stable_mosaic.version = 11 : i64} {
  func.func @_policy_kernel(%arg0: i32, %arg1: memref<1x8x8x16xf32, #tpu.memory_space<vmem>>, %arg2: memref<1x8x128xf32, #tpu.memory_space<vmem>>, %arg3: memref<16x128xbf16, #tpu.memory_space<vmem>>, %arg4: memref<1x128xf32, #tpu.memory_space<vmem>>, %arg5: memref<128x128xbf16, #tpu.memory_space<vmem>>, %arg6: memref<1x128xf32, #tpu.memory_space<vmem>>, %arg7: memref<128x384xbf16, #tpu.memory_space<vmem>>, %arg8: memref<1x384xf32, #tpu.memory_space<vmem>>, %arg9: memref<128x384xbf16, #tpu.memory_space<vmem>>, %arg10: memref<1x384xf32, #tpu.memory_space<vmem>>, %arg11: memref<128x128xbf16, #tpu.memory_space<vmem>>, %arg12: memref<1x128xf32, #tpu.memory_space<vmem>>, %arg13: memref<1x8x8x128xf32, #tpu.memory_space<vmem>>, %arg14: memref<1x8x8x1xf32, #tpu.memory_space<vmem>>, %arg15: memref<1x8x8x128xf32, #tpu.memory_space<vmem>>, %arg16: memref<1x8x128xf32, #tpu.memory_space<vmem>>, %arg17: memref<8x8x384xf32, #tpu.memory_space<vmem>>) attributes {dimension_semantics = [#tpu.dimension_semantics<parallel>], iteration_bounds = array<i64: 1>, scalar_prefetch = 0 : i64, scratch_operands = 1 : i64, tpu.core_type = #tpu.core_type<tc>, window_params = [{transform_indices = @transform_0, window_bounds = array<i64: 1, 8, 8, 16>}, {transform_indices = @transform_1, window_bounds = array<i64: 1, 8, 128>}, {pipeline_mode = #tpu.pipeline_mode<synchronous>, transform_indices = @transform_2, window_bounds = array<i64: 16, 128>}, {pipeline_mode = #tpu.pipeline_mode<synchronous>, transform_indices = @transform_3, window_bounds = array<i64: 1, 128>}, {pipeline_mode = #tpu.pipeline_mode<synchronous>, transform_indices = @transform_4, window_bounds = array<i64: 128, 128>}, {pipeline_mode = #tpu.pipeline_mode<synchronous>, transform_indices = @transform_5, window_bounds = array<i64: 1, 128>}, {pipeline_mode = #tpu.pipeline_mode<synchronous>, transform_indices = @transform_6, window_bounds = array<i64: 128, 384>}, {pipeline_mode = #tpu.pipeline_mode<synchronous>, transform_indices = @transform_7, window_bounds = array<i64: 1, 384>}, {pipeline_mode = #tpu.pipeline_mode<synchronous>, transform_indices = @transform_8, window_bounds = array<i64: 128, 384>}, {pipeline_mode = #tpu.pipeline_mode<synchronous>, transform_indices = @transform_9, window_bounds = array<i64: 1, 384>}, {pipeline_mode = #tpu.pipeline_mode<synchronous>, transform_indices = @transform_10, window_bounds = array<i64: 128, 128>}, {pipeline_mode = #tpu.pipeline_mode<synchronous>, transform_indices = @transform_11, window_bounds = array<i64: 1, 128>}, {transform_indices = @transform_12, window_bounds = array<i64: 1, 8, 8, 128>}, {transform_indices = @transform_13, window_bounds = array<i64: 1, 8, 8, 1>}, {transform_indices = @transform_14, window_bounds = array<i64: 1, 8, 8, 128>}, {transform_indices = @transform_15, window_bounds = array<i64: 1, 8, 128>}]} {
    %c0 = arith.constant 0 : index
    %c0_0 = arith.constant 0 : index
    %c0_1 = arith.constant 0 : index
    %c0_2 = arith.constant 0 : index
    %0 = vector.load %arg1[%c0, %c0_0, %c0_1, %c0_2] : memref<1x8x8x16xf32, #tpu.memory_space<vmem>>, vector<1x8x8x16xf32>
    %1 = vector.shape_cast %0 : vector<1x8x8x16xf32> to vector<8x8x16xf32>
    %2 = vector.shape_cast %1 : vector<8x8x16xf32> to vector<64x16xf32>
    %3 = arith.truncf %2 : vector<64x16xf32> to vector<64x16xbf16>
    %c0_3 = arith.constant 0 : index
    %c0_4 = arith.constant 0 : index
    %4 = vector.load %arg3[%c0_3, %c0_4] : memref<16x128xbf16, #tpu.memory_space<vmem>>, vector<16x128xbf16>
    %cst = arith.constant dense<0.000000e+00> : vector<64x128xf32>
    %5 = tpu.matmul %3, %4, %cst {dimension_numbers = #tpu.dot_dimension_numbers<[1], [0], [0], [1], [0, 0, 1, 1], [], []>} : vector<64x16xbf16>, vector<16x128xbf16>, vector<64x128xf32> -> vector<64x128xf32>
    %c0_5 = arith.constant 0 : index
    %c0_6 = arith.constant 0 : index
    %6 = vector.load %arg4[%c0_5, %c0_6] : memref<1x128xf32, #tpu.memory_space<vmem>>, vector<1x128xf32>
    %7 = vector.broadcast %6 : vector<1x128xf32> to vector<64x128xf32>
    %8 = arith.addf %5, %7 : vector<64x128xf32>
    %9 = math.tanh %8 : vector<64x128xf32>
    %10 = arith.truncf %9 : vector<64x128xf32> to vector<64x128xbf16>
    %c0_7 = arith.constant 0 : index
    %c0_8 = arith.constant 0 : index
    %11 = vector.load %arg5[%c0_7, %c0_8] : memref<128x128xbf16, #tpu.memory_space<vmem>>, vector<128x128xbf16>
    %cst_9 = arith.constant dense<0.000000e+00> : vector<64x128xf32>
    %12 = tpu.matmul %10, %11, %cst_9 {dimension_numbers = #tpu.dot_dimension_numbers<[1], [0], [0], [1], [0, 0, 1, 1], [], []>} : vector<64x128xbf16>, vector<128x128xbf16>, vector<64x128xf32> -> vector<64x128xf32>
    %c0_10 = arith.constant 0 : index
    %c0_11 = arith.constant 0 : index
    %13 = vector.load %arg6[%c0_10, %c0_11] : memref<1x128xf32, #tpu.memory_space<vmem>>, vector<1x128xf32>
    %14 = vector.broadcast %13 : vector<1x128xf32> to vector<64x128xf32>
    %15 = arith.addf %12, %14 : vector<64x128xf32>
    %16 = math.tanh %15 : vector<64x128xf32>
    %17 = arith.truncf %16 : vector<64x128xf32> to vector<64x128xbf16>
    %c0_12 = arith.constant 0 : index
    %c0_13 = arith.constant 0 : index
    %18 = vector.load %arg7[%c0_12, %c0_13] : memref<128x384xbf16, #tpu.memory_space<vmem>>, vector<128x384xbf16>
    %cst_14 = arith.constant dense<0.000000e+00> : vector<64x384xf32>
    %19 = tpu.matmul %17, %18, %cst_14 {dimension_numbers = #tpu.dot_dimension_numbers<[1], [0], [0], [1], [0, 0, 1, 1], [], []>} : vector<64x128xbf16>, vector<128x384xbf16>, vector<64x384xf32> -> vector<64x384xf32>
    %c0_15 = arith.constant 0 : index
    %c0_16 = arith.constant 0 : index
    %20 = vector.load %arg8[%c0_15, %c0_16] : memref<1x384xf32, #tpu.memory_space<vmem>>, vector<1x384xf32>
    %21 = vector.broadcast %20 : vector<1x384xf32> to vector<64x384xf32>
    %22 = arith.addf %19, %21 : vector<64x384xf32>
    %23 = vector.shape_cast %22 : vector<64x384xf32> to vector<8x8x384xf32>
    %c0_17 = arith.constant 0 : index
    %c0_18 = arith.constant 0 : index
    %c0_19 = arith.constant 0 : index
    %24 = vector.load %arg17[%c0_17, %c0_18, %c0_19] : memref<8x8x384xf32, #tpu.memory_space<vmem>>, vector<8x8x384xf32>
    tpu.vector_store %arg17[%c0_17, %c0_18, %c0_19], %23 {strides = array<i32>} : memref<8x8x384xf32, #tpu.memory_space<vmem>>, vector<8x8x384xf32>,
    %c0_20 = arith.constant 0 : index
    %c0_21 = arith.constant 0 : index
    %25 = vector.load %arg9[%c0_20, %c0_21] : memref<128x384xbf16, #tpu.memory_space<vmem>>, vector<128x384xbf16>
    %c0_22 = arith.constant 0 : index
    %c0_23 = arith.constant 0 : index
    %26 = vector.load %arg10[%c0_22, %c0_23] : memref<1x384xf32, #tpu.memory_space<vmem>>, vector<1x384xf32>
    %c0_24 = arith.constant 0 : index
    %c0_25 = arith.constant 0 : index
    %c0_26 = arith.constant 0 : index
    %27 = vector.load %arg2[%c0_24, %c0_25, %c0_26] : memref<1x8x128xf32, #tpu.memory_space<vmem>>, vector<1x8x128xf32>
    %28 = vector.shape_cast %27 : vector<1x8x128xf32> to vector<8x128xf32>
    %c0_27 = arith.constant 0 : index
    %c0_28 = arith.constant 0 : index
    %c0_29 = arith.constant 0 : index
    %29 = vector.load %arg17[%c0_27, %c0_28, %c0_29] : memref<8x8x384xf32, #tpu.memory_space<vmem>>, vector<1x8x384xf32>
    %30 = vector.shape_cast %29 : vector<1x8x384xf32> to vector<8x384xf32>
    %31 = arith.truncf %28 : vector<8x128xf32> to vector<8x128xbf16>
    %cst_30 = arith.constant dense<0.000000e+00> : vector<8x384xf32>
    %32 = tpu.matmul %31, %25, %cst_30 {dimension_numbers = #tpu.dot_dimension_numbers<[1], [0], [0], [1], [0, 0, 1, 1], [], []>} : vector<8x128xbf16>, vector<128x384xbf16>, vector<8x384xf32> -> vector<8x384xf32>
    %33 = vector.broadcast %26 : vector<1x384xf32> to vector<8x384xf32>
    %34 = arith.addf %32, %33 : vector<8x384xf32>
    %35 = vector.extract_strided_slice %30 {offsets = [0, 0], sizes = [8, 128], strides = [1, 1]} : vector<8x384xf32> to vector<8x128xf32>
    %36 = vector.extract_strided_slice %34 {offsets = [0, 0], sizes = [8, 128], strides = [1, 1]} : vector<8x384xf32> to vector<8x128xf32>
    %37 = arith.addf %35, %36 : vector<8x128xf32>
    %38 = arith.negf %37 : vector<8x128xf32>
    %39 = math.exp %38 : vector<8x128xf32>
    %cst_31 = arith.constant 1.000000e+00 : f32
    %40 = vector.broadcast %cst_31 : f32 to vector<8x128xf32>
    %41 = arith.addf %40, %39 : vector<8x128xf32>
    %42 = arith.divf %40, %41 : vector<8x128xf32>
    %43 = vector.extract_strided_slice %30 {offsets = [0, 128], sizes = [8, 128], strides = [1, 1]} : vector<8x384xf32> to vector<8x128xf32>
    %44 = vector.extract_strided_slice %34 {offsets = [0, 128], sizes = [8, 128], strides = [1, 1]} : vector<8x384xf32> to vector<8x128xf32>
    %45 = arith.addf %43, %44 : vector<8x128xf32>
    %46 = arith.negf %45 : vector<8x128xf32>
    %47 = math.exp %46 : vector<8x128xf32>
    %cst_32 = arith.constant 1.000000e+00 : f32
    %48 = vector.broadcast %cst_32 : f32 to vector<8x128xf32>
    %49 = arith.addf %48, %47 : vector<8x128xf32>
    %50 = arith.divf %48, %49 : vector<8x128xf32>
    %51 = vector.extract_strided_slice %30 {offsets = [0, 256], sizes = [8, 128], strides = [1, 1]} : vector<8x384xf32> to vector<8x128xf32>
    %52 = vector.extract_strided_slice %34 {offsets = [0, 256], sizes = [8, 128], strides = [1, 1]} : vector<8x384xf32> to vector<8x128xf32>
    %53 = arith.mulf %42, %52 : vector<8x128xf32>
    %54 = arith.addf %51, %53 : vector<8x128xf32>
    %55 = math.tanh %54 : vector<8x128xf32>
    %cst_33 = arith.constant 1.000000e+00 : f32
    %56 = vector.broadcast %cst_33 : f32 to vector<8x128xf32>
    %57 = arith.subf %56, %50 : vector<8x128xf32>
    %58 = arith.mulf %57, %55 : vector<8x128xf32>
    %59 = arith.mulf %50, %28 : vector<8x128xf32>
    %60 = arith.addf %58, %59 : vector<8x128xf32>
    %c0_34 = arith.constant 0 : index
    %c0_35 = arith.constant 0 : index
    %c0_36 = arith.constant 0 : index
    %c0_37 = arith.constant 0 : index
    %61 = vector.load %arg15[%c0_34, %c0_35, %c0_36, %c0_37] : memref<1x8x8x128xf32, #tpu.memory_space<vmem>>, vector<1x1x8x128xf32>
    %62 = vector.shape_cast %61 : vector<1x1x8x128xf32> to vector<8x128xf32>
    %63 = vector.shape_cast %60 : vector<8x128xf32> to vector<1x1x8x128xf32>
    tpu.vector_store %arg15[%c0_34, %c0_35, %c0_36, %c0_37], %63 {strides = array<i32>} : memref<1x8x8x128xf32, #tpu.memory_space<vmem>>, vector<1x1x8x128xf32>,
    %c1 = arith.constant 1 : index
    %c0_38 = arith.constant 0 : index
    %c0_39 = arith.constant 0 : index
    %64 = vector.load %arg17[%c1, %c0_38, %c0_39] : memref<8x8x384xf32, #tpu.memory_space<vmem>>, vector<1x8x384xf32>
    %65 = vector.shape_cast %64 : vector<1x8x384xf32> to vector<8x384xf32>
    %66 = arith.truncf %60 : vector<8x128xf32> to vector<8x128xbf16>
    %cst_40 = arith.constant dense<0.000000e+00> : vector<8x384xf32>
    %67 = tpu.matmul %66, %25, %cst_40 {dimension_numbers = #tpu.dot_dimension_numbers<[1], [0], [0], [1], [0, 0, 1, 1], [], []>} : vector<8x128xbf16>, vector<128x384xbf16>, vector<8x384xf32> -> vector<8x384xf32>
    %68 = vector.broadcast %26 : vector<1x384xf32> to vector<8x384xf32>
    %69 = arith.addf %67, %68 : vector<8x384xf32>
    %70 = vector.extract_strided_slice %65 {offsets = [0, 0], sizes = [8, 128], strides = [1, 1]} : vector<8x384xf32> to vector<8x128xf32>
    %71 = vector.extract_strided_slice %69 {offsets = [0, 0], sizes = [8, 128], strides = [1, 1]} : vector<8x384xf32> to vector<8x128xf32>
    %72 = arith.addf %70, %71 : vector<8x128xf32>
    %73 = arith.negf %72 : vector<8x128xf32>
    %74 = math.exp %73 : vector<8x128xf32>
    %cst_41 = arith.constant 1.000000e+00 : f32
    %75 = vector.broadcast %cst_41 : f32 to vector<8x128xf32>
    %76 = arith.addf %75, %74 : vector<8x128xf32>
    %77 = arith.divf %75, %76 : vector<8x128xf32>
    %78 = vector.extract_strided_slice %65 {offsets = [0, 128], sizes = [8, 128], strides = [1, 1]} : vector<8x384xf32> to vector<8x128xf32>
    %79 = vector.extract_strided_slice %69 {offsets = [0, 128], sizes = [8, 128], strides = [1, 1]} : vector<8x384xf32> to vector<8x128xf32>
    %80 = arith.addf %78, %79 : vector<8x128xf32>
    %81 = arith.negf %80 : vector<8x128xf32>
    %82 = math.exp %81 : vector<8x128xf32>
    %cst_42 = arith.constant 1.000000e+00 : f32
    %83 = vector.broadcast %cst_42 : f32 to vector<8x128xf32>
    %84 = arith.addf %83, %82 : vector<8x128xf32>
    %85 = arith.divf %83, %84 : vector<8x128xf32>
    %86 = vector.extract_strided_slice %65 {offsets = [0, 256], sizes = [8, 128], strides = [1, 1]} : vector<8x384xf32> to vector<8x128xf32>
    %87 = vector.extract_strided_slice %69 {offsets = [0, 256], sizes = [8, 128], strides = [1, 1]} : vector<8x384xf32> to vector<8x128xf32>
    %88 = arith.mulf %77, %87 : vector<8x128xf32>
    %89 = arith.addf %86, %88 : vector<8x128xf32>
    %90 = math.tanh %89 : vector<8x128xf32>
    %cst_43 = arith.constant 1.000000e+00 : f32
    %91 = vector.broadcast %cst_43 : f32 to vector<8x128xf32>
    %92 = arith.subf %91, %85 : vector<8x128xf32>
    %93 = arith.mulf %92, %90 : vector<8x128xf32>
    %94 = arith.mulf %85, %60 : vector<8x128xf32>
    %95 = arith.addf %93, %94 : vector<8x128xf32>
    %c0_44 = arith.constant 0 : index
    %c1_45 = arith.constant 1 : index
    %c0_46 = arith.constant 0 : index
    %c0_47 = arith.constant 0 : index
    %96 = vector.load %arg15[%c0_44, %c1_45, %c0_46, %c0_47] : memref<1x8x8x128xf32, #tpu.memory_space<vmem>>, vector<1x1x8x128xf32>
    %97 = vector.shape_cast %96 : vector<1x1x8x128xf32> to vector<8x128xf32>
    %98 = vector.shape_cast %95 : vector<8x128xf32> to vector<1x1x8x128xf32>
    tpu.vector_store %arg15[%c0_44, %c1_45, %c0_46, %c0_47], %98 {strides = array<i32>} : memref<1x8x8x128xf32, #tpu.memory_space<vmem>>, vector<1x1x8x128xf32>,
    %c2 = arith.constant 2 : index
    %c0_48 = arith.constant 0 : index
    %c0_49 = arith.constant 0 : index
    %99 = vector.load %arg17[%c2, %c0_48, %c0_49] : memref<8x8x384xf32, #tpu.memory_space<vmem>>, vector<1x8x384xf32>
    %100 = vector.shape_cast %99 : vector<1x8x384xf32> to vector<8x384xf32>
    %101 = arith.truncf %95 : vector<8x128xf32> to vector<8x128xbf16>
    %cst_50 = arith.constant dense<0.000000e+00> : vector<8x384xf32>
    %102 = tpu.matmul %101, %25, %cst_50 {dimension_numbers = #tpu.dot_dimension_numbers<[1], [0], [0], [1], [0, 0, 1, 1], [], []>} : vector<8x128xbf16>, vector<128x384xbf16>, vector<8x384xf32> -> vector<8x384xf32>
    %103 = vector.broadcast %26 : vector<1x384xf32> to vector<8x384xf32>
    %104 = arith.addf %102, %103 : vector<8x384xf32>
    %105 = vector.extract_strided_slice %100 {offsets = [0, 0], sizes = [8, 128], strides = [1, 1]} : vector<8x384xf32> to vector<8x128xf32>
    %106 = vector.extract_strided_slice %104 {offsets = [0, 0], sizes = [8, 128], strides = [1, 1]} : vector<8x384xf32> to vector<8x128xf32>
    %107 = arith.addf %105, %106 : vector<8x128xf32>
    %108 = arith.negf %107 : vector<8x128xf32>
    %109 = math.exp %108 : vector<8x128xf32>
    %cst_51 = arith.constant 1.000000e+00 : f32
    %110 = vector.broadcast %cst_51 : f32 to vector<8x128xf32>
    %111 = arith.addf %110, %109 : vector<8x128xf32>
    %112 = arith.divf %110, %111 : vector<8x128xf32>
    %113 = vector.extract_strided_slice %100 {offsets = [0, 128], sizes = [8, 128], strides = [1, 1]} : vector<8x384xf32> to vector<8x128xf32>
    %114 = vector.extract_strided_slice %104 {offsets = [0, 128], sizes = [8, 128], strides = [1, 1]} : vector<8x384xf32> to vector<8x128xf32>
    %115 = arith.addf %113, %114 : vector<8x128xf32>
    %116 = arith.negf %115 : vector<8x128xf32>
    %117 = math.exp %116 : vector<8x128xf32>
    %cst_52 = arith.constant 1.000000e+00 : f32
    %118 = vector.broadcast %cst_52 : f32 to vector<8x128xf32>
    %119 = arith.addf %118, %117 : vector<8x128xf32>
    %120 = arith.divf %118, %119 : vector<8x128xf32>
    %121 = vector.extract_strided_slice %100 {offsets = [0, 256], sizes = [8, 128], strides = [1, 1]} : vector<8x384xf32> to vector<8x128xf32>
    %122 = vector.extract_strided_slice %104 {offsets = [0, 256], sizes = [8, 128], strides = [1, 1]} : vector<8x384xf32> to vector<8x128xf32>
    %123 = arith.mulf %112, %122 : vector<8x128xf32>
    %124 = arith.addf %121, %123 : vector<8x128xf32>
    %125 = math.tanh %124 : vector<8x128xf32>
    %cst_53 = arith.constant 1.000000e+00 : f32
    %126 = vector.broadcast %cst_53 : f32 to vector<8x128xf32>
    %127 = arith.subf %126, %120 : vector<8x128xf32>
    %128 = arith.mulf %127, %125 : vector<8x128xf32>
    %129 = arith.mulf %120, %95 : vector<8x128xf32>
    %130 = arith.addf %128, %129 : vector<8x128xf32>
    %c0_54 = arith.constant 0 : index
    %c2_55 = arith.constant 2 : index
    %c0_56 = arith.constant 0 : index
    %c0_57 = arith.constant 0 : index
    %131 = vector.load %arg15[%c0_54, %c2_55, %c0_56, %c0_57] : memref<1x8x8x128xf32, #tpu.memory_space<vmem>>, vector<1x1x8x128xf32>
    %132 = vector.shape_cast %131 : vector<1x1x8x128xf32> to vector<8x128xf32>
    %133 = vector.shape_cast %130 : vector<8x128xf32> to vector<1x1x8x128xf32>
    tpu.vector_store %arg15[%c0_54, %c2_55, %c0_56, %c0_57], %133 {strides = array<i32>} : memref<1x8x8x128xf32, #tpu.memory_space<vmem>>, vector<1x1x8x128xf32>,
    %c3 = arith.constant 3 : index
    %c0_58 = arith.constant 0 : index
    %c0_59 = arith.constant 0 : index
    %134 = vector.load %arg17[%c3, %c0_58, %c0_59] : memref<8x8x384xf32, #tpu.memory_space<vmem>>, vector<1x8x384xf32>
    %135 = vector.shape_cast %134 : vector<1x8x384xf32> to vector<8x384xf32>
    %136 = arith.truncf %130 : vector<8x128xf32> to vector<8x128xbf16>
    %cst_60 = arith.constant dense<0.000000e+00> : vector<8x384xf32>
    %137 = tpu.matmul %136, %25, %cst_60 {dimension_numbers = #tpu.dot_dimension_numbers<[1], [0], [0], [1], [0, 0, 1, 1], [], []>} : vector<8x128xbf16>, vector<128x384xbf16>, vector<8x384xf32> -> vector<8x384xf32>
    %138 = vector.broadcast %26 : vector<1x384xf32> to vector<8x384xf32>
    %139 = arith.addf %137, %138 : vector<8x384xf32>
    %140 = vector.extract_strided_slice %135 {offsets = [0, 0], sizes = [8, 128], strides = [1, 1]} : vector<8x384xf32> to vector<8x128xf32>
    %141 = vector.extract_strided_slice %139 {offsets = [0, 0], sizes = [8, 128], strides = [1, 1]} : vector<8x384xf32> to vector<8x128xf32>
    %142 = arith.addf %140, %141 : vector<8x128xf32>
    %143 = arith.negf %142 : vector<8x128xf32>
    %144 = math.exp %143 : vector<8x128xf32>
    %cst_61 = arith.constant 1.000000e+00 : f32
    %145 = vector.broadcast %cst_61 : f32 to vector<8x128xf32>
    %146 = arith.addf %145, %144 : vector<8x128xf32>
    %147 = arith.divf %145, %146 : vector<8x128xf32>
    %148 = vector.extract_strided_slice %135 {offsets = [0, 128], sizes = [8, 128], strides = [1, 1]} : vector<8x384xf32> to vector<8x128xf32>
    %149 = vector.extract_strided_slice %139 {offsets = [0, 128], sizes = [8, 128], strides = [1, 1]} : vector<8x384xf32> to vector<8x128xf32>
    %150 = arith.addf %148, %149 : vector<8x128xf32>
    %151 = arith.negf %150 : vector<8x128xf32>
    %152 = math.exp %151 : vector<8x128xf32>
    %cst_62 = arith.constant 1.000000e+00 : f32
    %153 = vector.broadcast %cst_62 : f32 to vector<8x128xf32>
    %154 = arith.addf %153, %152 : vector<8x128xf32>
    %155 = arith.divf %153, %154 : vector<8x128xf32>
    %156 = vector.extract_strided_slice %135 {offsets = [0, 256], sizes = [8, 128], strides = [1, 1]} : vector<8x384xf32> to vector<8x128xf32>
    %157 = vector.extract_strided_slice %139 {offsets = [0, 256], sizes = [8, 128], strides = [1, 1]} : vector<8x384xf32> to vector<8x128xf32>
    %158 = arith.mulf %147, %157 : vector<8x128xf32>
    %159 = arith.addf %156, %158 : vector<8x128xf32>
    %160 = math.tanh %159 : vector<8x128xf32>
    %cst_63 = arith.constant 1.000000e+00 : f32
    %161 = vector.broadcast %cst_63 : f32 to vector<8x128xf32>
    %162 = arith.subf %161, %155 : vector<8x128xf32>
    %163 = arith.mulf %162, %160 : vector<8x128xf32>
    %164 = arith.mulf %155, %130 : vector<8x128xf32>
    %165 = arith.addf %163, %164 : vector<8x128xf32>
    %c0_64 = arith.constant 0 : index
    %c3_65 = arith.constant 3 : index
    %c0_66 = arith.constant 0 : index
    %c0_67 = arith.constant 0 : index
    %166 = vector.load %arg15[%c0_64, %c3_65, %c0_66, %c0_67] : memref<1x8x8x128xf32, #tpu.memory_space<vmem>>, vector<1x1x8x128xf32>
    %167 = vector.shape_cast %166 : vector<1x1x8x128xf32> to vector<8x128xf32>
    %168 = vector.shape_cast %165 : vector<8x128xf32> to vector<1x1x8x128xf32>
    tpu.vector_store %arg15[%c0_64, %c3_65, %c0_66, %c0_67], %168 {strides = array<i32>} : memref<1x8x8x128xf32, #tpu.memory_space<vmem>>, vector<1x1x8x128xf32>,
    %c4 = arith.constant 4 : index
    %c0_68 = arith.constant 0 : index
    %c0_69 = arith.constant 0 : index
    %169 = vector.load %arg17[%c4, %c0_68, %c0_69] : memref<8x8x384xf32, #tpu.memory_space<vmem>>, vector<1x8x384xf32>
    %170 = vector.shape_cast %169 : vector<1x8x384xf32> to vector<8x384xf32>
    %171 = arith.truncf %165 : vector<8x128xf32> to vector<8x128xbf16>
    %cst_70 = arith.constant dense<0.000000e+00> : vector<8x384xf32>
    %172 = tpu.matmul %171, %25, %cst_70 {dimension_numbers = #tpu.dot_dimension_numbers<[1], [0], [0], [1], [0, 0, 1, 1], [], []>} : vector<8x128xbf16>, vector<128x384xbf16>, vector<8x384xf32> -> vector<8x384xf32>
    %173 = vector.broadcast %26 : vector<1x384xf32> to vector<8x384xf32>
    %174 = arith.addf %172, %173 : vector<8x384xf32>
    %175 = vector.extract_strided_slice %170 {offsets = [0, 0], sizes = [8, 128], strides = [1, 1]} : vector<8x384xf32> to vector<8x128xf32>
    %176 = vector.extract_strided_slice %174 {offsets = [0, 0], sizes = [8, 128], strides = [1, 1]} : vector<8x384xf32> to vector<8x128xf32>
    %177 = arith.addf %175, %176 : vector<8x128xf32>
    %178 = arith.negf %177 : vector<8x128xf32>
    %179 = math.exp %178 : vector<8x128xf32>
    %cst_71 = arith.constant 1.000000e+00 : f32
    %180 = vector.broadcast %cst_71 : f32 to vector<8x128xf32>
    %181 = arith.addf %180, %179 : vector<8x128xf32>
    %182 = arith.divf %180, %181 : vector<8x128xf32>
    %183 = vector.extract_strided_slice %170 {offsets = [0, 128], sizes = [8, 128], strides = [1, 1]} : vector<8x384xf32> to vector<8x128xf32>
    %184 = vector.extract_strided_slice %174 {offsets = [0, 128], sizes = [8, 128], strides = [1, 1]} : vector<8x384xf32> to vector<8x128xf32>
    %185 = arith.addf %183, %184 : vector<8x128xf32>
    %186 = arith.negf %185 : vector<8x128xf32>
    %187 = math.exp %186 : vector<8x128xf32>
    %cst_72 = arith.constant 1.000000e+00 : f32
    %188 = vector.broadcast %cst_72 : f32 to vector<8x128xf32>
    %189 = arith.addf %188, %187 : vector<8x128xf32>
    %190 = arith.divf %188, %189 : vector<8x128xf32>
    %191 = vector.extract_strided_slice %170 {offsets = [0, 256], sizes = [8, 128], strides = [1, 1]} : vector<8x384xf32> to vector<8x128xf32>
    %192 = vector.extract_strided_slice %174 {offsets = [0, 256], sizes = [8, 128], strides = [1, 1]} : vector<8x384xf32> to vector<8x128xf32>
    %193 = arith.mulf %182, %192 : vector<8x128xf32>
    %194 = arith.addf %191, %193 : vector<8x128xf32>
    %195 = math.tanh %194 : vector<8x128xf32>
    %cst_73 = arith.constant 1.000000e+00 : f32
    %196 = vector.broadcast %cst_73 : f32 to vector<8x128xf32>
    %197 = arith.subf %196, %190 : vector<8x128xf32>
    %198 = arith.mulf %197, %195 : vector<8x128xf32>
    %199 = arith.mulf %190, %165 : vector<8x128xf32>
    %200 = arith.addf %198, %199 : vector<8x128xf32>
    %c0_74 = arith.constant 0 : index
    %c4_75 = arith.constant 4 : index
    %c0_76 = arith.constant 0 : index
    %c0_77 = arith.constant 0 : index
    %201 = vector.load %arg15[%c0_74, %c4_75, %c0_76, %c0_77] : memref<1x8x8x128xf32, #tpu.memory_space<vmem>>, vector<1x1x8x128xf32>
    %202 = vector.shape_cast %201 : vector<1x1x8x128xf32> to vector<8x128xf32>
    %203 = vector.shape_cast %200 : vector<8x128xf32> to vector<1x1x8x128xf32>
    tpu.vector_store %arg15[%c0_74, %c4_75, %c0_76, %c0_77], %203 {strides = array<i32>} : memref<1x8x8x128xf32, #tpu.memory_space<vmem>>, vector<1x1x8x128xf32>,
    %c5 = arith.constant 5 : index
    %c0_78 = arith.constant 0 : index
    %c0_79 = arith.constant 0 : index
    %204 = vector.load %arg17[%c5, %c0_78, %c0_79] : memref<8x8x384xf32, #tpu.memory_space<vmem>>, vector<1x8x384xf32>
    %205 = vector.shape_cast %204 : vector<1x8x384xf32> to vector<8x384xf32>
    %206 = arith.truncf %200 : vector<8x128xf32> to vector<8x128xbf16>
    %cst_80 = arith.constant dense<0.000000e+00> : vector<8x384xf32>
    %207 = tpu.matmul %206, %25, %cst_80 {dimension_numbers = #tpu.dot_dimension_numbers<[1], [0], [0], [1], [0, 0, 1, 1], [], []>} : vector<8x128xbf16>, vector<128x384xbf16>, vector<8x384xf32> -> vector<8x384xf32>
    %208 = vector.broadcast %26 : vector<1x384xf32> to vector<8x384xf32>
    %209 = arith.addf %207, %208 : vector<8x384xf32>
    %210 = vector.extract_strided_slice %205 {offsets = [0, 0], sizes = [8, 128], strides = [1, 1]} : vector<8x384xf32> to vector<8x128xf32>
    %211 = vector.extract_strided_slice %209 {offsets = [0, 0], sizes = [8, 128], strides = [1, 1]} : vector<8x384xf32> to vector<8x128xf32>
    %212 = arith.addf %210, %211 : vector<8x128xf32>
    %213 = arith.negf %212 : vector<8x128xf32>
    %214 = math.exp %213 : vector<8x128xf32>
    %cst_81 = arith.constant 1.000000e+00 : f32
    %215 = vector.broadcast %cst_81 : f32 to vector<8x128xf32>
    %216 = arith.addf %215, %214 : vector<8x128xf32>
    %217 = arith.divf %215, %216 : vector<8x128xf32>
    %218 = vector.extract_strided_slice %205 {offsets = [0, 128], sizes = [8, 128], strides = [1, 1]} : vector<8x384xf32> to vector<8x128xf32>
    %219 = vector.extract_strided_slice %209 {offsets = [0, 128], sizes = [8, 128], strides = [1, 1]} : vector<8x384xf32> to vector<8x128xf32>
    %220 = arith.addf %218, %219 : vector<8x128xf32>
    %221 = arith.negf %220 : vector<8x128xf32>
    %222 = math.exp %221 : vector<8x128xf32>
    %cst_82 = arith.constant 1.000000e+00 : f32
    %223 = vector.broadcast %cst_82 : f32 to vector<8x128xf32>
    %224 = arith.addf %223, %222 : vector<8x128xf32>
    %225 = arith.divf %223, %224 : vector<8x128xf32>
    %226 = vector.extract_strided_slice %205 {offsets = [0, 256], sizes = [8, 128], strides = [1, 1]} : vector<8x384xf32> to vector<8x128xf32>
    %227 = vector.extract_strided_slice %209 {offsets = [0, 256], sizes = [8, 128], strides = [1, 1]} : vector<8x384xf32> to vector<8x128xf32>
    %228 = arith.mulf %217, %227 : vector<8x128xf32>
    %229 = arith.addf %226, %228 : vector<8x128xf32>
    %230 = math.tanh %229 : vector<8x128xf32>
    %cst_83 = arith.constant 1.000000e+00 : f32
    %231 = vector.broadcast %cst_83 : f32 to vector<8x128xf32>
    %232 = arith.subf %231, %225 : vector<8x128xf32>
    %233 = arith.mulf %232, %230 : vector<8x128xf32>
    %234 = arith.mulf %225, %200 : vector<8x128xf32>
    %235 = arith.addf %233, %234 : vector<8x128xf32>
    %c0_84 = arith.constant 0 : index
    %c5_85 = arith.constant 5 : index
    %c0_86 = arith.constant 0 : index
    %c0_87 = arith.constant 0 : index
    %236 = vector.load %arg15[%c0_84, %c5_85, %c0_86, %c0_87] : memref<1x8x8x128xf32, #tpu.memory_space<vmem>>, vector<1x1x8x128xf32>
    %237 = vector.shape_cast %236 : vector<1x1x8x128xf32> to vector<8x128xf32>
    %238 = vector.shape_cast %235 : vector<8x128xf32> to vector<1x1x8x128xf32>
    tpu.vector_store %arg15[%c0_84, %c5_85, %c0_86, %c0_87], %238 {strides = array<i32>} : memref<1x8x8x128xf32, #tpu.memory_space<vmem>>, vector<1x1x8x128xf32>,
    %c6 = arith.constant 6 : index
    %c0_88 = arith.constant 0 : index
    %c0_89 = arith.constant 0 : index
    %239 = vector.load %arg17[%c6, %c0_88, %c0_89] : memref<8x8x384xf32, #tpu.memory_space<vmem>>, vector<1x8x384xf32>
    %240 = vector.shape_cast %239 : vector<1x8x384xf32> to vector<8x384xf32>
    %241 = arith.truncf %235 : vector<8x128xf32> to vector<8x128xbf16>
    %cst_90 = arith.constant dense<0.000000e+00> : vector<8x384xf32>
    %242 = tpu.matmul %241, %25, %cst_90 {dimension_numbers = #tpu.dot_dimension_numbers<[1], [0], [0], [1], [0, 0, 1, 1], [], []>} : vector<8x128xbf16>, vector<128x384xbf16>, vector<8x384xf32> -> vector<8x384xf32>
    %243 = vector.broadcast %26 : vector<1x384xf32> to vector<8x384xf32>
    %244 = arith.addf %242, %243 : vector<8x384xf32>
    %245 = vector.extract_strided_slice %240 {offsets = [0, 0], sizes = [8, 128], strides = [1, 1]} : vector<8x384xf32> to vector<8x128xf32>
    %246 = vector.extract_strided_slice %244 {offsets = [0, 0], sizes = [8, 128], strides = [1, 1]} : vector<8x384xf32> to vector<8x128xf32>
    %247 = arith.addf %245, %246 : vector<8x128xf32>
    %248 = arith.negf %247 : vector<8x128xf32>
    %249 = math.exp %248 : vector<8x128xf32>
    %cst_91 = arith.constant 1.000000e+00 : f32
    %250 = vector.broadcast %cst_91 : f32 to vector<8x128xf32>
    %251 = arith.addf %250, %249 : vector<8x128xf32>
    %252 = arith.divf %250, %251 : vector<8x128xf32>
    %253 = vector.extract_strided_slice %240 {offsets = [0, 128], sizes = [8, 128], strides = [1, 1]} : vector<8x384xf32> to vector<8x128xf32>
    %254 = vector.extract_strided_slice %244 {offsets = [0, 128], sizes = [8, 128], strides = [1, 1]} : vector<8x384xf32> to vector<8x128xf32>
    %255 = arith.addf %253, %254 : vector<8x128xf32>
    %256 = arith.negf %255 : vector<8x128xf32>
    %257 = math.exp %256 : vector<8x128xf32>
    %cst_92 = arith.constant 1.000000e+00 : f32
    %258 = vector.broadcast %cst_92 : f32 to vector<8x128xf32>
    %259 = arith.addf %258, %257 : vector<8x128xf32>
    %260 = arith.divf %258, %259 : vector<8x128xf32>
    %261 = vector.extract_strided_slice %240 {offsets = [0, 256], sizes = [8, 128], strides = [1, 1]} : vector<8x384xf32> to vector<8x128xf32>
    %262 = vector.extract_strided_slice %244 {offsets = [0, 256], sizes = [8, 128], strides = [1, 1]} : vector<8x384xf32> to vector<8x128xf32>
    %263 = arith.mulf %252, %262 : vector<8x128xf32>
    %264 = arith.addf %261, %263 : vector<8x128xf32>
    %265 = math.tanh %264 : vector<8x128xf32>
    %cst_93 = arith.constant 1.000000e+00 : f32
    %266 = vector.broadcast %cst_93 : f32 to vector<8x128xf32>
    %267 = arith.subf %266, %260 : vector<8x128xf32>
    %268 = arith.mulf %267, %265 : vector<8x128xf32>
    %269 = arith.mulf %260, %235 : vector<8x128xf32>
    %270 = arith.addf %268, %269 : vector<8x128xf32>
    %c0_94 = arith.constant 0 : index
    %c6_95 = arith.constant 6 : index
    %c0_96 = arith.constant 0 : index
    %c0_97 = arith.constant 0 : index
    %271 = vector.load %arg15[%c0_94, %c6_95, %c0_96, %c0_97] : memref<1x8x8x128xf32, #tpu.memory_space<vmem>>, vector<1x1x8x128xf32>
    %272 = vector.shape_cast %271 : vector<1x1x8x128xf32> to vector<8x128xf32>
    %273 = vector.shape_cast %270 : vector<8x128xf32> to vector<1x1x8x128xf32>
    tpu.vector_store %arg15[%c0_94, %c6_95, %c0_96, %c0_97], %273 {strides = array<i32>} : memref<1x8x8x128xf32, #tpu.memory_space<vmem>>, vector<1x1x8x128xf32>,
    %c7 = arith.constant 7 : index
    %c0_98 = arith.constant 0 : index
    %c0_99 = arith.constant 0 : index
    %274 = vector.load %arg17[%c7, %c0_98, %c0_99] : memref<8x8x384xf32, #tpu.memory_space<vmem>>, vector<1x8x384xf32>
    %275 = vector.shape_cast %274 : vector<1x8x384xf32> to vector<8x384xf32>
    %276 = arith.truncf %270 : vector<8x128xf32> to vector<8x128xbf16>
    %cst_100 = arith.constant dense<0.000000e+00> : vector<8x384xf32>
    %277 = tpu.matmul %276, %25, %cst_100 {dimension_numbers = #tpu.dot_dimension_numbers<[1], [0], [0], [1], [0, 0, 1, 1], [], []>} : vector<8x128xbf16>, vector<128x384xbf16>, vector<8x384xf32> -> vector<8x384xf32>
    %278 = vector.broadcast %26 : vector<1x384xf32> to vector<8x384xf32>
    %279 = arith.addf %277, %278 : vector<8x384xf32>
    %280 = vector.extract_strided_slice %275 {offsets = [0, 0], sizes = [8, 128], strides = [1, 1]} : vector<8x384xf32> to vector<8x128xf32>
    %281 = vector.extract_strided_slice %279 {offsets = [0, 0], sizes = [8, 128], strides = [1, 1]} : vector<8x384xf32> to vector<8x128xf32>
    %282 = arith.addf %280, %281 : vector<8x128xf32>
    %283 = arith.negf %282 : vector<8x128xf32>
    %284 = math.exp %283 : vector<8x128xf32>
    %cst_101 = arith.constant 1.000000e+00 : f32
    %285 = vector.broadcast %cst_101 : f32 to vector<8x128xf32>
    %286 = arith.addf %285, %284 : vector<8x128xf32>
    %287 = arith.divf %285, %286 : vector<8x128xf32>
    %288 = vector.extract_strided_slice %275 {offsets = [0, 128], sizes = [8, 128], strides = [1, 1]} : vector<8x384xf32> to vector<8x128xf32>
    %289 = vector.extract_strided_slice %279 {offsets = [0, 128], sizes = [8, 128], strides = [1, 1]} : vector<8x384xf32> to vector<8x128xf32>
    %290 = arith.addf %288, %289 : vector<8x128xf32>
    %291 = arith.negf %290 : vector<8x128xf32>
    %292 = math.exp %291 : vector<8x128xf32>
    %cst_102 = arith.constant 1.000000e+00 : f32
    %293 = vector.broadcast %cst_102 : f32 to vector<8x128xf32>
    %294 = arith.addf %293, %292 : vector<8x128xf32>
    %295 = arith.divf %293, %294 : vector<8x128xf32>
    %296 = vector.extract_strided_slice %275 {offsets = [0, 256], sizes = [8, 128], strides = [1, 1]} : vector<8x384xf32> to vector<8x128xf32>
    %297 = vector.extract_strided_slice %279 {offsets = [0, 256], sizes = [8, 128], strides = [1, 1]} : vector<8x384xf32> to vector<8x128xf32>
    %298 = arith.mulf %287, %297 : vector<8x128xf32>
    %299 = arith.addf %296, %298 : vector<8x128xf32>
    %300 = math.tanh %299 : vector<8x128xf32>
    %cst_103 = arith.constant 1.000000e+00 : f32
    %301 = vector.broadcast %cst_103 : f32 to vector<8x128xf32>
    %302 = arith.subf %301, %295 : vector<8x128xf32>
    %303 = arith.mulf %302, %300 : vector<8x128xf32>
    %304 = arith.mulf %295, %270 : vector<8x128xf32>
    %305 = arith.addf %303, %304 : vector<8x128xf32>
    %c0_104 = arith.constant 0 : index
    %c7_105 = arith.constant 7 : index
    %c0_106 = arith.constant 0 : index
    %c0_107 = arith.constant 0 : index
    %306 = vector.load %arg15[%c0_104, %c7_105, %c0_106, %c0_107] : memref<1x8x8x128xf32, #tpu.memory_space<vmem>>, vector<1x1x8x128xf32>
    %307 = vector.shape_cast %306 : vector<1x1x8x128xf32> to vector<8x128xf32>
    %308 = vector.shape_cast %305 : vector<8x128xf32> to vector<1x1x8x128xf32>
    tpu.vector_store %arg15[%c0_104, %c7_105, %c0_106, %c0_107], %308 {strides = array<i32>} : memref<1x8x8x128xf32, #tpu.memory_space<vmem>>, vector<1x1x8x128xf32>,
    %c0_108 = arith.constant 0 : index
    %c0_109 = arith.constant 0 : index
    %c0_110 = arith.constant 0 : index
    %309 = vector.load %arg16[%c0_108, %c0_109, %c0_110] : memref<1x8x128xf32, #tpu.memory_space<vmem>>, vector<1x8x128xf32>
    %310 = vector.shape_cast %309 : vector<1x8x128xf32> to vector<8x128xf32>
    %311 = vector.shape_cast %305 : vector<8x128xf32> to vector<1x8x128xf32>
    tpu.vector_store %arg16[%c0_108, %c0_109, %c0_110], %311 {strides = array<i32>} : memref<1x8x128xf32, #tpu.memory_space<vmem>>, vector<1x8x128xf32>,
    %c0_111 = arith.constant 0 : index
    %c0_112 = arith.constant 0 : index
    %c0_113 = arith.constant 0 : index
    %c0_114 = arith.constant 0 : index
    %312 = vector.load %arg15[%c0_111, %c0_112, %c0_113, %c0_114] : memref<1x8x8x128xf32, #tpu.memory_space<vmem>>, vector<1x8x8x128xf32>
    %313 = vector.shape_cast %312 : vector<1x8x8x128xf32> to vector<8x8x128xf32>
    %314 = vector.shape_cast %313 : vector<8x8x128xf32> to vector<64x128xf32>
    %315 = arith.truncf %314 : vector<64x128xf32> to vector<64x128xbf16>
    %c0_115 = arith.constant 0 : index
    %c0_116 = arith.constant 0 : index
    %316 = vector.load %arg11[%c0_115, %c0_116] : memref<128x128xbf16, #tpu.memory_space<vmem>>, vector<128x128xbf16>
    %cst_117 = arith.constant dense<0.000000e+00> : vector<64x128xf32>
    %317 = tpu.matmul %315, %316, %cst_117 {dimension_numbers = #tpu.dot_dimension_numbers<[1], [0], [0], [1], [0, 0, 1, 1], [], []>} : vector<64x128xbf16>, vector<128x128xbf16>, vector<64x128xf32> -> vector<64x128xf32>
    %c0_118 = arith.constant 0 : index
    %c0_119 = arith.constant 0 : index
    %318 = vector.load %arg12[%c0_118, %c0_119] : memref<1x128xf32, #tpu.memory_space<vmem>>, vector<1x128xf32>
    %319 = vector.broadcast %318 : vector<1x128xf32> to vector<64x128xf32>
    %320 = arith.addf %317, %319 : vector<64x128xf32>
    %cst_120 = arith.constant dense<0xFF800000> : vector<64xf32>
    %321 = vector.multi_reduction <maximumf>, %320, %cst_120 [1] : vector<64x128xf32> to vector<64xf32>
    %322 = vector.shape_cast %321 : vector<64xf32> to vector<64x1xf32>
    %323 = vector.broadcast %322 : vector<64x1xf32> to vector<64x128xf32>
    %324 = arith.subf %320, %323 : vector<64x128xf32>
    %325 = math.exp %324 : vector<64x128xf32>
    %cst_121 = arith.constant dense<0.000000e+00> : vector<64xf32>
    %326 = vector.multi_reduction <add>, %325, %cst_121 [1] : vector<64x128xf32> to vector<64xf32>
    %327 = vector.shape_cast %326 : vector<64xf32> to vector<64x1xf32>
    %328 = math.log %327 : vector<64x1xf32>
    %329 = arith.addf %322, %328 : vector<64x1xf32>
    %330 = vector.shape_cast %320 : vector<64x128xf32> to vector<8x8x128xf32>
    %c0_122 = arith.constant 0 : index
    %c0_123 = arith.constant 0 : index
    %c0_124 = arith.constant 0 : index
    %c0_125 = arith.constant 0 : index
    %331 = vector.load %arg13[%c0_122, %c0_123, %c0_124, %c0_125] : memref<1x8x8x128xf32, #tpu.memory_space<vmem>>, vector<1x8x8x128xf32>
    %332 = vector.shape_cast %331 : vector<1x8x8x128xf32> to vector<8x8x128xf32>
    %333 = vector.shape_cast %330 : vector<8x8x128xf32> to vector<1x8x8x128xf32>
    tpu.vector_store %arg13[%c0_122, %c0_123, %c0_124, %c0_125], %333 {strides = array<i32>} : memref<1x8x8x128xf32, #tpu.memory_space<vmem>>, vector<1x8x8x128xf32>,
    %334 = vector.shape_cast %329 : vector<64x1xf32> to vector<8x8x1xf32>
    %c0_126 = arith.constant 0 : index
    %c0_127 = arith.constant 0 : index
    %c0_128 = arith.constant 0 : index
    %c0_129 = arith.constant 0 : index
    %335 = vector.load %arg14[%c0_126, %c0_127, %c0_128, %c0_129] : memref<1x8x8x1xf32, #tpu.memory_space<vmem>>, vector<1x8x8x1xf32>
    %336 = vector.shape_cast %335 : vector<1x8x8x1xf32> to vector<8x8x1xf32>
    %337 = vector.shape_cast %334 : vector<8x8x1xf32> to vector<1x8x8x1xf32>
    tpu.vector_store %arg14[%c0_126, %c0_127, %c0_128, %c0_129], %337 {strides = array<i32>} : memref<1x8x8x1xf32, #tpu.memory_space<vmem>>, vector<1x8x8x1xf32>,
    return
  }
  func.func @transform_0(%arg0: i32) -> (i32, i32, i32, i32) {
    %c0_i32 = arith.constant 0 : i32
    %c0_i32_0 = arith.constant 0 : i32
    %c0_i32_1 = arith.constant 0 : i32
    %c0_i32_2 = arith.constant 0 : i32
    return %arg0, %c0_i32, %c0_i32_0, %c0_i32_1 : i32, i32, i32, i32
  }
  func.func @transform_1(%arg0: i32) -> (i32, i32, i32) {
    %c0_i32 = arith.constant 0 : i32
    %c0_i32_0 = arith.constant 0 : i32
    %c0_i32_1 = arith.constant 0 : i32
    return %arg0, %c0_i32, %c0_i32_0 : i32, i32, i32
  }
  func.func @transform_2(%arg0: i32) -> (i32, i32) {
    %c0_i32 = arith.constant 0 : i32
    %c0_i32_0 = arith.constant 0 : i32
    %c0_i32_1 = arith.constant 0 : i32
    return %c0_i32, %c0_i32_0 : i32, i32
  }
  func.func @transform_3(%arg0: i32) -> (i32, i32) {
    %c0_i32 = arith.constant 0 : i32
    %c0_i32_0 = arith.constant 0 : i32
    %c0_i32_1 = arith.constant 0 : i32
    return %c0_i32, %c0_i32_0 : i32, i32
  }
  func.func @transform_4(%arg0: i32) -> (i32, i32) {
    %c0_i32 = arith.constant 0 : i32
    %c0_i32_0 = arith.constant 0 : i32
    %c0_i32_1 = arith.constant 0 : i32
    return %c0_i32, %c0_i32_0 : i32, i32
  }
  func.func @transform_5(%arg0: i32) -> (i32, i32) {
    %c0_i32 = arith.constant 0 : i32
    %c0_i32_0 = arith.constant 0 : i32
    %c0_i32_1 = arith.constant 0 : i32
    return %c0_i32, %c0_i32_0 : i32, i32
  }
  func.func @transform_6(%arg0: i32) -> (i32, i32) {
    %c0_i32 = arith.constant 0 : i32
    %c0_i32_0 = arith.constant 0 : i32
    %c0_i32_1 = arith.constant 0 : i32
    return %c0_i32, %c0_i32_0 : i32, i32
  }
  func.func @transform_7(%arg0: i32) -> (i32, i32) {
    %c0_i32 = arith.constant 0 : i32
    %c0_i32_0 = arith.constant 0 : i32
    %c0_i32_1 = arith.constant 0 : i32
    return %c0_i32, %c0_i32_0 : i32, i32
  }
  func.func @transform_8(%arg0: i32) -> (i32, i32) {
    %c0_i32 = arith.constant 0 : i32
    %c0_i32_0 = arith.constant 0 : i32
    %c0_i32_1 = arith.constant 0 : i32
    return %c0_i32, %c0_i32_0 : i32, i32
  }
  func.func @transform_9(%arg0: i32) -> (i32, i32) {
    %c0_i32 = arith.constant 0 : i32
    %c0_i32_0 = arith.constant 0 : i32
    %c0_i32_1 = arith.constant 0 : i32
    return %c0_i32, %c0_i32_0 : i32, i32
  }
  func.func @transform_10(%arg0: i32) -> (i32, i32) {
    %c0_i32 = arith.constant 0 : i32
    %c0_i32_0 = arith.constant 0 : i32
    %c0_i32_1 = arith.constant 0 : i32
    return %c0_i32, %c0_i32_0 : i32, i32
  }
  func.func @transform_11(%arg0: i32) -> (i32, i32) {
    %c0_i32 = arith.constant 0 : i32
    %c0_i32_0 = arith.constant 0 : i32
    %c0_i32_1 = arith.constant 0 : i32
    return %c0_i32, %c0_i32_0 : i32, i32
  }
  func.func @transform_12(%arg0: i32) -> (i32, i32, i32, i32) {
    %c0_i32 = arith.constant 0 : i32
    %c0_i32_0 = arith.constant 0 : i32
    %c0_i32_1 = arith.constant 0 : i32
    %c0_i32_2 = arith.constant 0 : i32
    return %arg0, %c0_i32, %c0_i32_0, %c0_i32_1 : i32, i32, i32, i32
  }
  func.func @transform_13(%arg0: i32) -> (i32, i32, i32, i32) {
    %c0_i32 = arith.constant 0 : i32
    %c0_i32_0 = arith.constant 0 : i32
    %c0_i32_1 = arith.constant 0 : i32
    %c0_i32_2 = arith.constant 0 : i32
    return %arg0, %c0_i32, %c0_i32_0, %c0_i32_1 : i32, i32, i32, i32
  }
  func.func @transform_14(%arg0: i32) -> (i32, i32, i32, i32) {
    %c0_i32 = arith.constant 0 : i32
    %c0_i32_0 = arith.constant 0 : i32
    %c0_i32_1 = arith.constant 0 : i32
    %c0_i32_2 = arith.constant 0 : i32
    return %arg0, %c0_i32, %c0_i32_0, %c0_i32_1 : i32, i32, i32, i32
  }
  func.func @transform_15(%arg0: i32) -> (i32, i32, i32) {
    %c0_i32 = arith.constant 0 : i32
    %c0_i32_0 = arith.constant 0 : i32
    %c0_i32_1 = arith.constant 0 : i32
    return %arg0, %c0_i32, %c0_i32_0 : i32, i32, i32
  }
}

</mosaic_0001>

<llo_original>
// kernel: rnn_categorical_policy_forward.1
$region0: #{rnn_categorical_policy_forward.1}
  #allocation0 [shape = 'u32[]', space=smem, size = 0x4, offset = 0x4, fixed_abs, tag = 'smem constant byte address 0x4 - core index']
  #allocation1 [shape = 'u32[72,128]{1,0:T(1,128)}', space=vmem, size = 0x9000, scoped, tag = 'internal scratch']
  #allocation2 [shape = 'f32[8,8,384]{2,1,0:T(8,128)}', space=vmem, size = 0x18000, scoped, tag = 'scratch operand']
  %s0 = inlined_call_operand.vmem [shape: f32[1,8,8,16], index: 0, kind: input, shape index: {}]
  %s1 = inlined_call_operand.vmem [shape: f32[1,8,128], index: 1, kind: input, shape index: {}]
  %s2 = inlined_call_operand.vmem [shape: bf16[16,128], index: 2, kind: input, shape index: {}]
  %s3 = inlined_call_operand.vmem [shape: f32[1,128], index: 3, kind: input, shape index: {}]
  %s4 = inlined_call_operand.vmem [shape: bf16[128,128], index: 4, kind: input, shape index: {}]
  %s5 = inlined_call_operand.vmem [shape: f32[1,128], index: 5, kind: input, shape index: {}]
  %s6 = inlined_call_operand.vmem [shape: bf16[128,384], index: 6, kind: input, shape index: {}]
  %s7 = inlined_call_operand.vmem [shape: f32[1,384], index: 7, kind: input, shape index: {}]
  %s8 = inlined_call_operand.vmem [shape: bf16[128,384], index: 8, kind: input, shape index: {}]
  %s9 = inlined_call_operand.vmem [shape: f32[1,384], index: 9, kind: input, shape index: {}]
  %s10 = inlined_call_operand.vmem [shape: bf16[128,128], index: 10, kind: input, shape index: {}]
  %s11 = inlined_call_operand.vmem [shape: f32[1,128], index: 11, kind: input, shape index: {}]
  %s12 = inlined_call_operand.vmem [shape: f32[1,8,8,128], index: 12, kind: output, shape index: {0}]
  %s13 = inlined_call_operand.vmem [shape: f32[1,8,8,1], index: 13, kind: output, shape index: {1}]
  %s14 = inlined_call_operand.vmem [shape: f32[1,8,8,128], index: 14, kind: output, shape index: {2}]
  %s15 = inlined_call_operand.vmem [shape: f32[1,8,128], index: 15, kind: output, shape index: {3}]
  %16 = xla_tuple %s12, %s13, %s14, %s15
  %s17 = sld [smem:[#allocation0]]
  $region82: #{rnn_categorical_policy_forward.1} parent=0
    _
  %s19 = ssub.s32 1, %s17
  %s20 = scalar_select 0, %s19, %s17
  // Predicated region
  $region2: #{rnn_categorical_policy_forward.1} parent=0 // pred_check
    _
  $region3: #{rnn_categorical_policy_forward.1} parent=0 // pred_check_branch
    %22 = sbr.rel (0) target = $region5
  $region4: #{rnn_categorical_policy_forward.1} parent=0 // pred_region
    _
  $region5: #{rnn_categorical_policy_forward.1} parent=0 // pred_fallthru
    _
  // Predicated region
  $region6: #{rnn_categorical_policy_forward.1} parent=0 // pred_check
    _
  $region7: #{rnn_categorical_policy_forward.1} parent=0 // pred_check_branch
    %24 = sbr.rel (0) target = $region9
  $region8: #{rnn_categorical_policy_forward.1} parent=0 // pred_region
    _
  $region9: #{rnn_categorical_policy_forward.1} parent=0 // pred_fallthru
    _
  // Predicated region
  $region10: #{rnn_categorical_policy_forward.1} parent=0 // pred_check
    _
  $region11: #{rnn_categorical_policy_forward.1} parent=0 // pred_check_branch
    %26 = sbr.rel (0) target = $region13
  $region12: #{rnn_categorical_policy_forward.1} parent=0 // pred_region
    _
  $region13: #{rnn_categorical_policy_forward.1} parent=0 // pred_fallthru
    _
  // Predicated region
  $region14: #{rnn_categorical_policy_forward.1} parent=0 // pred_check
    _
  $region15: #{rnn_categorical_policy_forward.1} parent=0 // pred_check_branch
    %28 = sbr.rel (0) target = $region17
  $region16: #{rnn_categorical_policy_forward.1} parent=0 // pred_region
    _
  $region17: #{rnn_categorical_policy_forward.1} parent=0 // pred_fallthru
    _
  // Predicated region
  $region18: #{rnn_categorical_policy_forward.1} parent=0 // pred_check
    _
  $region19: #{rnn_categorical_policy_forward.1} parent=0 // pred_check_branch
    %30 = sbr.rel (0) target = $region21
  $region20: #{rnn_categorical_policy_forward.1} parent=0 // pred_region
    _
  $region21: #{rnn_categorical_policy_forward.1} parent=0 // pred_fallthru
    _
  // Predicated region
  $region22: #{rnn_categorical_policy_forward.1} parent=0 // pred_check
    _
  $region23: #{rnn_categorical_policy_forward.1} parent=0 // pred_check_branch
    %32 = sbr.rel (0) target = $region25
  $region24: #{rnn_categorical_policy_forward.1} parent=0 // pred_region
    _
  $region25: #{rnn_categorical_policy_forward.1} parent=0 // pred_fallthru
    _
  // Predicated region
  $region26: #{rnn_categorical_policy_forward.1} parent=0 // pred_check
    _
  $region27: #{rnn_categorical_policy_forward.1} parent=0 // pred_check_branch
    %34 = sbr.rel (0) target = $region29
  $region28: #{rnn_categorical_policy_forward.1} parent=0 // pred_region
    _
  $region29: #{rnn_categorical_policy_forward.1} parent=0 // pred_fallthru
    _
  // Predicated region
  $region30: #{rnn_categorical_policy_forward.1} parent=0 // pred_check
    _
  $region31: #{rnn_categorical_policy_forward.1} parent=0 // pred_check_branch
    %36 = sbr.rel (0) target = $region33
  $region32: #{rnn_categorical_policy_forward.1} parent=0 // pred_region
    _
  $region33: #{rnn_categorical_policy_forward.1} parent=0 // pred_fallthru
    _
  // Predicated region
  $region34: #{rnn_categorical_policy_forward.1} parent=0 // pred_check
    _
  $region35: #{rnn_categorical_policy_forward.1} parent=0 // pred_check_branch
    %38 = sbr.rel (0) target = $region37
  $region36: #{rnn_categorical_policy_forward.1} parent=0 // pred_region
    _
  $region37: #{rnn_categorical_policy_forward.1} parent=0 // pred_fallthru
    _
  // Predicated region
  $region38: #{rnn_categorical_policy_forward.1} parent=0 // pred_check
    _
  $region39: #{rnn_categorical_policy_forward.1} parent=0 // pred_check_branch
    %40 = sbr.rel (0) target = $region41
  $region40: #{rnn_categorical_policy_forward.1} parent=0 // pred_region
    _
  $region41: #{rnn_categorical_policy_forward.1} parent=0 // pred_fallthru
    _
  // Predicated region
  $region42: #{rnn_categorical_policy_forward.1} parent=0 // pred_check
    _
  $region43: #{rnn_categorical_policy_forward.1} parent=0 // pred_check_branch
    %42 = sbr.rel (0) target = $region45
  $region44: #{rnn_categorical_policy_forward.1} parent=0 // pred_region
    _
  $region45: #{rnn_categorical_policy_forward.1} parent=0 // pred_fallthru
    _
  // Predicated region
  $region46: #{rnn_categorical_policy_forward.1} parent=0 // pred_check
    _
  $region47: #{rnn_categorical_policy_forward.1} parent=0 // pred_check_branch
    %44 = sbr.rel (0) target = $region49
  $region48: #{rnn_categorical_policy_forward.1} parent=0 // pred_region
    _
  $region49: #{rnn_categorical_policy_forward.1} parent=0 // pred_fallthru
    _
  %v46 = vld [vmem:[%s0] sm:$0xff]
  %v47 = vld [vmem:[%s0 + $0x8] sm:$0xff]
  %v48 = vld [vmem:[%s0 + $0x10] sm:$0xff]
  %v49 = vld [vmem:[%s0 + $0x18] sm:$0xff]
  %v50 = vld [vmem:[%s0 + $0x20] sm:$0xff]
  %v51 = vld [vmem:[%s0 + $0x28] sm:$0xff]
  %v52 = vld [vmem:[%s0 + $0x30] sm:$0xff]
  %v53 = vld [vmem:[%s0 + $0x38] sm:$0xff]
  %v54 = vpack.c.bf16 %v47, %v46
  %v55 = vpack.c.bf16 %v49, %v48
  %v56 = vpack.c.bf16 %v51, %v50
  %v57 = vpack.c.bf16 %v53, %v52
  %v58 = vld [vmem:[%s2] sm:$0xf]
  %v59 = vld [vmem:[%s2 + $0x4] sm:$0xf]
  %v60 = vld [vmem:[%s3] sm:$0x1]
  %v62 = vperm.slane %v60, 0
  %v66 = vunpack.c.l.b16 %v58
  %v67 = vunpack.c.l.b16 %v59
  %v68 = vpack.c.b16 %v67, %v66
  %vm70 = vcmask 130048
  %v72 = vsel %vm70, %v54, 0
  %v75 = vsel %vm70, %v55, 0
  %v78 = vsel %vm70, %v56, 0
  %v81 = vsel %vm70, %v57, 0
  %83 = vmatpush.bf16.msra.mxu0 0
  %84 = vmatpush.bf16.msra.mxu0 0
  %85 = vmatpush.bf16.msra.mxu0 0
  %86 = vmatpush.bf16.msra.mxu0 0
  %87 = vmatpush.bf16.msra.mxu0 0
  %88 = vmatpush.bf16.msra.mxu0 0
  %89 = vmatpush.bf16.msra.mxu0 0
  %90 = vmatpush.bf16.msra.mxu0 %v68
  %91 = vmatmul.bf16.gmra.mxu0 %v72
  %v92 = vpop.f32.mrf.mxu0
  %v93 = vadd.f32 %v62, %v92
  %v94 = vpop.f32.mrf.mxu0
  %v95 = vadd.f32 %v62, %v94
  %96 = vmatmul.bf16.gmra.mxu0 %v75
  %v97 = vpop.f32.mrf.mxu0
  %v98 = vadd.f32 %v62, %v97
  %v99 = vpop.f32.mrf.mxu0
  %v100 = vadd.f32 %v62, %v99
  %101 = vmatmul.bf16.gmra.mxu0 %v78
  %v102 = vpop.f32.mrf.mxu0
  %v103 = vadd.f32 %v62, %v102
  %v104 = vpop.f32.mrf.mxu0
  %v105 = vadd.f32 %v62, %v104
  %106 = vmatmul.bf16.gmra.mxu0 %v81
  %v107 = vpop.f32.mrf.mxu0
  %v108 = vadd.f32 %v62, %v107
  %v109 = vpop.f32.mrf.mxu0
  %v110 = vadd.f32 %v62, %v109
  %111 = vdwg.mxu0
  %v112 = vtanh.pop %v93
  %v113 = vtanh.pop %v95
  %v114 = vtanh.pop %v98
  %v115 = vtanh.pop %v100
  %v116 = vtanh.pop %v103
  %v117 = vtanh.pop %v105
  %v118 = vtanh.pop %v108
  %v119 = vtanh.pop %v110
  %v120 = vpack.c.bf16 %v113, %v112
  %v121 = vpack.c.bf16 %v115, %v114
  %v122 = vpack.c.bf16 %v117, %v116
  %v123 = vpack.c.bf16 %v119, %v118
  %v124 = vld [vmem:[%s4] sm:$0xf]
  %v125 = vld [vmem:[%s4 + $0x4] sm:$0xf]
  %v126 = vld [vmem:[%s4 + $0x8] sm:$0xf]
  %v127 = vld [vmem:[%s4 + $0xc] sm:$0xf]
  %v128 = vld [vmem:[%s4 + $0x10] sm:$0xf]
  %v129 = vld [vmem:[%s4 + $0x14] sm:$0xf]
  %v130 = vld [vmem:[%s4 + $0x18] sm:$0xf]
  %v131 = vld [vmem:[%s4 + $0x1c] sm:$0xf]
  %v132 = vld [vmem:[%s4 + $0x20] sm:$0xf]
  %v133 = vld [vmem:[%s4 + $0x24] sm:$0xf]
  %v134 = vld [vmem:[%s4 + $0x28] sm:$0xf]
  %v135 = vld [vmem:[%s4 + $0x2c] sm:$0xf]
  %v136 = vld [vmem:[%s4 + $0x30] sm:$0xf]
  %v137 = vld [vmem:[%s4 + $0x34] sm:$0xf]
  %v138 = vld [vmem:[%s4 + $0x38] sm:$0xf]
  %v139 = vld [vmem:[%s4 + $0x3c] sm:$0xf]
  %v140 = vld [vmem:[%s5] sm:$0x1]
  %v142 = vperm.slane %v140, 0
  %v160 = vunpack.c.l.b16 %v124
  %v161 = vunpack.c.l.b16 %v125
  %v162 = vunpack.c.l.b16 %v126
  %v163 = vunpack.c.l.b16 %v127
  %v164 = vunpack.c.l.b16 %v128
  %v165 = vunpack.c.l.b16 %v129
  %v166 = vunpack.c.l.b16 %v130
  %v167 = vunpack.c.l.b16 %v131
  %v168 = vunpack.c.l.b16 %v132
  %v169 = vunpack.c.l.b16 %v133
  %v170 = vunpack.c.l.b16 %v134
  %v171 = vunpack.c.l.b16 %v135
  %v172 = vunpack.c.l.b16 %v136
  %v173 = vunpack.c.l.b16 %v137
  %v174 = vunpack.c.l.b16 %v138
  %v175 = vunpack.c.l.b16 %v139
  %v176 = vpack.c.b16 %v161, %v160
  %v177 = vpack.c.b16 %v163, %v162
  %v178 = vpack.c.b16 %v165, %v164
  %v179 = vpack.c.b16 %v167, %v166
  %v180 = vpack.c.b16 %v169, %v168
  %v181 = vpack.c.b16 %v171, %v170
  %v182 = vpack.c.b16 %v173, %v172
  %v183 = vpack.c.b16 %v175, %v174
  %192 = vmatpush.bf16.msra.mxu0 %v183
  %193 = vmatpush.bf16.msra.mxu0 %v182
  %194 = vmatpush.bf16.msra.mxu0 %v181
  %195 = vmatpush.bf16.msra.mxu0 %v180
  %196 = vmatpush.bf16.msra.mxu0 %v179
  %197 = vmatpush.bf16.msra.mxu0 %v178
  %198 = vmatpush.bf16.msra.mxu0 %v177
  %199 = vmatpush.bf16.msra.mxu0 %v176
  %200 = vmatmul.bf16.gmra.mxu0 %v120
  %v201 = vpop.f32.mrf.mxu0
  %v202 = vadd.f32 %v142, %v201
  %v203 = vpop.f32.mrf.mxu0
  %v204 = vadd.f32 %v142, %v203
  %205 = vmatmul.bf16.gmra.mxu0 %v121
  %v206 = vpop.f32.mrf.mxu0
  %v207 = vadd.f32 %v142, %v206
  %v208 = vpop.f32.mrf.mxu0
  %v209 = vadd.f32 %v142, %v208
  %210 = vmatmul.bf16.gmra.mxu0 %v122
  %v211 = vpop.f32.mrf.mxu0
  %v212 = vadd.f32 %v142, %v211
  %v213 = vpop.f32.mrf.mxu0
  %v214 = vadd.f32 %v142, %v213
  %215 = vmatmul.bf16.gmra.mxu0 %v123
  %v216 = vpop.f32.mrf.mxu0
  %v217 = vadd.f32 %v142, %v216
  %v218 = vpop.f32.mrf.mxu0
  %v219 = vadd.f32 %v142, %v218
  %220 = vdwg.mxu0
  %v221 = vtanh.pop %v202
  %v222 = vtanh.pop %v204
  %v223 = vtanh.pop %v207
  %v224 = vtanh.pop %v209
  %v225 = vtanh.pop %v212
  %v226 = vtanh.pop %v214
  %v227 = vtanh.pop %v217
  %v228 = vtanh.pop %v219
  %v229 = vpack.c.bf16 %v222, %v221
  %v230 = vpack.c.bf16 %v224, %v223
  %v231 = vpack.c.bf16 %v226, %v225
  %v232 = vpack.c.bf16 %v228, %v227
  %v233 = vld [vmem:[%s6] sm:$0xff]
  %v234 = vld [vmem:[%s6 + $0x8] sm:$0xf]
  %v235 = vld [vmem:[%s6 + $0xc] sm:$0xff]
  %v236 = vld [vmem:[%s6 + $0x14] sm:$0xf]
  %v237 = vld [vmem:[%s6 + $0x18] sm:$0xff]
  %v238 = vld [vmem:[%s6 + $0x20] sm:$0xf]
  %v239 = vld [vmem:[%s6 + $0x24] sm:$0xff]
  %v240 = vld [vmem:[%s6 + $0x2c] sm:$0xf]
  %v241 = vld [vmem:[%s6 + $0x30] sm:$0xff]
  %v242 = vld [vmem:[%s6 + $0x38] sm:$0xf]
  %v243 = vld [vmem:[%s6 + $0x3c] sm:$0xff]
  %v244 = vld [vmem:[%s6 + $0x44] sm:$0xf]
  %v245 = vld [vmem:[%s6 + $0x48] sm:$0xff]
  %v246 = vld [vmem:[%s6 + $0x50] sm:$0xf]
  %v247 = vld [vmem:[%s6 + $0x54] sm:$0xff]
  %v248 = vld [vmem:[%s6 + $0x5c] sm:$0xf]
  %v249 = vld [vmem:[%s6 + $0x60] sm:$0xff]
  %v250 = vld [vmem:[%s6 + $0x68] sm:$0xf]
  %v251 = vld [vmem:[%s6 + $0x6c] sm:$0xff]
  %v252 = vld [vmem:[%s6 + $0x74] sm:$0xf]
  %v253 = vld [vmem:[%s6 + $0x78] sm:$0xff]
  %v254 = vld [vmem:[%s6 + $0x80] sm:$0xf]
  %v255 = vld [vmem:[%s6 + $0x84] sm:$0xff]
  %v256 = vld [vmem:[%s6 + $0x8c] sm:$0xf]
  %v257 = vld [vmem:[%s6 + $0x90] sm:$0xff]
  %v258 = vld [vmem:[%s6 + $0x98] sm:$0xf]
  %v259 = vld [vmem:[%s6 + $0x9c] sm:$0xff]
  %v260 = vld [vmem:[%s6 + $0xa4] sm:$0xf]
  %v261 = vld [vmem:[%s6 + $0xa8] sm:$0xff]
  %v262 = vld [vmem:[%s6 + $0xb0] sm:$0xf]
  %v263 = vld [vmem:[%s6 + $0xb4] sm:$0xff]
  %v264 = vld [vmem:[%s6 + $0xbc] sm:$0xf]
  %v265 = vld [vmem:[%s7] sm:$0x7]
  %v267 = vperm.slane %v265, 0
  %v268 = vperm.slane %v265, 1
  %v269 = vperm.slane %v265, 2
  %v305 = vunpack.c.l.b16 %v233
  %v306 = vunpack.c.h.b16 %v233
  %v307 = vunpack.c.l.b16 %v234
  %v308 = vunpack.c.l.b16 %v235
  %v309 = vunpack.c.h.b16 %v235
  %v310 = vunpack.c.l.b16 %v236
  %v311 = vunpack.c.l.b16 %v237
  %v312 = vunpack.c.h.b16 %v237
  %v313 = vunpack.c.l.b16 %v238
  %v314 = vunpack.c.l.b16 %v239
  %v315 = vunpack.c.h.b16 %v239
  %v316 = vunpack.c.l.b16 %v240
  %v317 = vunpack.c.l.b16 %v241
  %v318 = vunpack.c.h.b16 %v241
  %v319 = vunpack.c.l.b16 %v242
  %v320 = vunpack.c.l.b16 %v243
  %v321 = vunpack.c.h.b16 %v243
  %v322 = vunpack.c.l.b16 %v244
  %v323 = vunpack.c.l.b16 %v245
  %v324 = vunpack.c.h.b16 %v245
  %v325 = vunpack.c.l.b16 %v246
  %v326 = vunpack.c.l.b16 %v247
  %v327 = vunpack.c.h.b16 %v247
  %v328 = vunpack.c.l.b16 %v248
  %v329 = vunpack.c.l.b16 %v249
  %v330 = vunpack.c.h.b16 %v249
  %v331 = vunpack.c.l.b16 %v250
  %v332 = vunpack.c.l.b16 %v251
  %v333 = vunpack.c.h.b16 %v251
  %v334 = vunpack.c.l.b16 %v252
  %v335 = vunpack.c.l.b16 %v253
  %v336 = vunpack.c.h.b16 %v253
  %v337 = vunpack.c.l.b16 %v254
  %v338 = vunpack.c.l.b16 %v255
  %v339 = vunpack.c.h.b16 %v255
  %v340 = vunpack.c.l.b16 %v256
  %v341 = vunpack.c.l.b16 %v257
  %v342 = vunpack.c.h.b16 %v257
  %v343 = vunpack.c.l.b16 %v258
  %v344 = vunpack.c.l.b16 %v259
  %v345 = vunpack.c.h.b16 %v259
  %v346 = vunpack.c.l.b16 %v260
  %v347 = vunpack.c.l.b16 %v261
  %v348 = vunpack.c.h.b16 %v261
  %v349 = vunpack.c.l.b16 %v262
  %v350 = vunpack.c.l.b16 %v263
  %v351 = vunpack.c.h.b16 %v263
  %v352 = vunpack.c.l.b16 %v264
  %v353 = vpack.c.b16 %v308, %v305
  %v354 = vpack.c.b16 %v309, %v306
  %v355 = vpack.c.b16 %v310, %v307
  %v356 = vpack.c.b16 %v314, %v311
  %v357 = vpack.c.b16 %v315, %v312
  %v358 = vpack.c.b16 %v316, %v313
  %v359 = vpack.c.b16 %v320, %v317
  %v360 = vpack.c.b16 %v321, %v318
  %v361 = vpack.c.b16 %v322, %v319
  %v362 = vpack.c.b16 %v326, %v323
  %v363 = vpack.c.b16 %v327, %v324
  %v364 = vpack.c.b16 %v328, %v325
  %v365 = vpack.c.b16 %v332, %v329
  %v366 = vpack.c.b16 %v333, %v330
  %v367 = vpack.c.b16 %v334, %v331
  %v368 = vpack.c.b16 %v338, %v335
  %v369 = vpack.c.b16 %v339, %v336
  %v370 = vpack.c.b16 %v340, %v337
  %v371 = vpack.c.b16 %v344, %v341
  %v372 = vpack.c.b16 %v345, %v342
  %v373 = vpack.c.b16 %v346, %v343
  %v374 = vpack.c.b16 %v350, %v347
  %v375 = vpack.c.b16 %v351, %v348
  %v376 = vpack.c.b16 %v352, %v349
  %401 = vmatpush.bf16.msra.mxu0 %v374
  %402 = vmatpush.bf16.msra.mxu0 %v371
  %403 = vmatpush.bf16.msra.mxu0 %v368
  %404 = vmatpush.bf16.msra.mxu0 %v365
  %405 = vmatpush.bf16.msra.mxu0 %v362
  %406 = vmatpush.bf16.msra.mxu0 %v359
  %407 = vmatpush.bf16.msra.mxu0 %v356
  %408 = vmatpush.bf16.msra.mxu0 %v353
  %409 = vmatmul.bf16.gmra.mxu0 %v229
  %v410 = vpop.f32.mrf.mxu0
  %v411 = vadd.f32 %v267, %v410
  %v412 = vpop.f32.mrf.mxu0
  %v413 = vadd.f32 %v267, %v412
  %414 = vmatmul.bf16.gmra.mxu0 %v230
  %v415 = vpop.f32.mrf.mxu0
  %v416 = vadd.f32 %v267, %v415
  %v417 = vpop.f32.mrf.mxu0
  %v418 = vadd.f32 %v267, %v417
  %419 = vmatmul.bf16.gmra.mxu0 %v231
  %v420 = vpop.f32.mrf.mxu0
  %v421 = vadd.f32 %v267, %v420
  %v422 = vpop.f32.mrf.mxu0
  %v423 = vadd.f32 %v267, %v422
  %424 = vmatmul.bf16.gmra.mxu0 %v232
  %v425 = vpop.f32.mrf.mxu0
  %v426 = vadd.f32 %v267, %v425
  %v427 = vpop.f32.mrf.mxu0
  %v428 = vadd.f32 %v267, %v427
  %429 = vdwg.mxu0
  %430 = vmatpush.bf16.msra.mxu0 %v375
  %431 = vmatpush.bf16.msra.mxu0 %v372
  %432 = vmatpush.bf16.msra.mxu0 %v369
  %433 = vmatpush.bf16.msra.mxu0 %v366
  %434 = vmatpush.bf16.msra.mxu0 %v363
  %435 = vmatpush.bf16.msra.mxu0 %v360
  %436 = vmatpush.bf16.msra.mxu0 %v357
  %437 = vmatpush.bf16.msra.mxu0 %v354
  %438 = vmatmul.bf16.gmra.mxu0 %v229
  %v439 = vpop.f32.mrf.mxu0
  %v440 = vadd.f32 %v268, %v439
  %v441 = vpop.f32.mrf.mxu0
  %v442 = vadd.f32 %v268, %v441
  %443 = vmatmul.bf16.gmra.mxu0 %v230
  %v444 = vpop.f32.mrf.mxu0
  %v445 = vadd.f32 %v268, %v444
  %v446 = vpop.f32.mrf.mxu0
  %v447 = vadd.f32 %v268, %v446
  %448 = vmatmul.bf16.gmra.mxu0 %v231
  %v449 = vpop.f32.mrf.mxu0
  %v450 = vadd.f32 %v268, %v449
  %v451 = vpop.f32.mrf.mxu0
  %v452 = vadd.f32 %v268, %v451
  %453 = vmatmul.bf16.gmra.mxu0 %v232
  %v454 = vpop.f32.mrf.mxu0
  %v455 = vadd.f32 %v268, %v454
  %v456 = vpop.f32.mrf.mxu0
  %v457 = vadd.f32 %v268, %v456
  %458 = vdwg.mxu0
  %459 = vmatpush.bf16.msra.mxu0 %v376
  %460 = vmatpush.bf16.msra.mxu0 %v373
  %461 = vmatpush.bf16.msra.mxu0 %v370
  %462 = vmatpush.bf16.msra.mxu0 %v367
  %463 = vmatpush.bf16.msra.mxu0 %v364
  %464 = vmatpush.bf16.msra.mxu0 %v361
  %465 = vmatpush.bf16.msra.mxu0 %v358
  %466 = vmatpush.bf16.msra.mxu0 %v355
  %467 = vmatmul.bf16.gmra.mxu0 %v229
  %v468 = vpop.f32.mrf.mxu0
  %v469 = vadd.f32 %v269, %v468
  %v470 = vpop.f32.mrf.mxu0
  %v471 = vadd.f32 %v269, %v470
  %472 = vmatmul.bf16.gmra.mxu0 %v230
  %v473 = vpop.f32.mrf.mxu0
  %v474 = vadd.f32 %v269, %v473
  %v475 = vpop.f32.mrf.mxu0
  %v476 = vadd.f32 %v269, %v475
  %477 = vmatmul.bf16.gmra.mxu0 %v231
  %v478 = vpop.f32.mrf.mxu0
  %v479 = vadd.f32 %v269, %v478
  %v480 = vpop.f32.mrf.mxu0
  %v481 = vadd.f32 %v269, %v480
  %482 = vmatmul.bf16.gmra.mxu0 %v232
  %v483 = vpop.f32.mrf.mxu0
  %v484 = vadd.f32 %v269, %v483
  %v485 = vpop.f32.mrf.mxu0
  %v486 = vadd.f32 %v269, %v485
  %487 = vdwg.mxu0
  %488 = vst [vmem:[#allocation2] sm:$0xff] %v411
  %489 = vst [vmem:[#allocation2 + $0x8] sm:$0xff] %v440
  %490 = vst [vmem:[#allocation2 + $0x10] sm:$0xff] %v469
  %491 = vst [vmem:[#allocation2 + $0x18] sm:$0xff] %v413
  %492 = vst [vmem:[#allocation2 + $0x20] sm:$0xff] %v442
  %493 = vst [vmem:[#allocation2 + $0x28] sm:$0xff] %v471
  %494 = vst [vmem:[#allocation2 + $0x30] sm:$0xff] %v416
  %495 = vst [vmem:[#allocation2 + $0x38] sm:$0xff] %v445
  %496 = vst [vmem:[#allocation2 + $0x40] sm:$0xff] %v474
  %497 = vst [vmem:[#allocation2 + $0x48] sm:$0xff] %v418
  %498 = vst [vmem:[#allocation2 + $0x50] sm:$0xff] %v447
  %499 = vst [vmem:[#allocation2 + $0x58] sm:$0xff] %v476
  %500 = vst [vmem:[#allocation2 + $0x60] sm:$0xff] %v421
  %501 = vst [vmem:[#allocation2 + $0x68] sm:$0xff] %v450
  %502 = vst [vmem:[#allocation2 + $0x70] sm:$0xff] %v479
  %503 = vst [vmem:[#allocation2 + $0x78] sm:$0xff] %v423
  %504 = vst [vmem:[#allocation2 + $0x80] sm:$0xff] %v452
  %505 = vst [vmem:[#allocation2 + $0x88] sm:$0xff] %v481
  %506 = vst [vmem:[#allocation2 + $0x90] sm:$0xff] %v426
  %507 = vst [vmem:[#allocation2 + $0x98] sm:$0xff] %v455
  %508 = vst [vmem:[#allocation2 + $0xa0] sm:$0xff] %v484
  %509 = vst [vmem:[#allocation2 + $0xa8] sm:$0xff] %v428
  %510 = vst [vmem:[#allocation2 + $0xb0] sm:$0xff] %v457
  %511 = vst [vmem:[#allocation2 + $0xb8] sm:$0xff] %v486
  %v512 = vld [vmem:[%s8] sm:$0xff]
  %v513 = vld [vmem:[%s8 + $0x8] sm:$0xf]
  %v514 = vld [vmem:[%s8 + $0xc] sm:$0xff]
  %v515 = vld [vmem:[%s8 + $0x14] sm:$0xf]
  %v516 = vld [vmem:[%s8 + $0x18] sm:$0xff]
  %v517 = vld [vmem:[%s8 + $0x20] sm:$0xf]
  %v518 = vld [vmem:[%s8 + $0x24] sm:$0xff]
  %v519 = vld [vmem:[%s8 + $0x2c] sm:$0xf]
  %v520 = vld [vmem:[%s8 + $0x30] sm:$0xff]
  %v521 = vld [vmem:[%s8 + $0x38] sm:$0xf]
  %v522 = vld [vmem:[%s8 + $0x3c] sm:$0xff]
  %v523 = vld [vmem:[%s8 + $0x44] sm:$0xf]
  %v524 = vld [vmem:[%s8 + $0x48] sm:$0xff]
  %v525 = vld [vmem:[%s8 + $0x50] sm:$0xf]
  %v526 = vld [vmem:[%s8 + $0x54] sm:$0xff]
  %v527 = vld [vmem:[%s8 + $0x5c] sm:$0xf]
  %v528 = vld [vmem:[%s8 + $0x60] sm:$0xff]
  %v529 = vld [vmem:[%s8 + $0x68] sm:$0xf]
  %v530 = vld [vmem:[%s8 + $0x6c] sm:$0xff]
  %v531 = vld [vmem:[%s8 + $0x74] sm:$0xf]
  %v532 = vld [vmem:[%s8 + $0x78] sm:$0xff]
  %v533 = vld [vmem:[%s8 + $0x80] sm:$0xf]
  %v534 = vld [vmem:[%s8 + $0x84] sm:$0xff]
  %v535 = vld [vmem:[%s8 + $0x8c] sm:$0xf]
  %v536 = vld [vmem:[%s8 + $0x90] sm:$0xff]
  %v537 = vld [vmem:[%s8 + $0x98] sm:$0xf]
  %v538 = vld [vmem:[%s8 + $0x9c] sm:$0xff]
  %v539 = vld [vmem:[%s8 + $0xa4] sm:$0xf]
  %v540 = vld [vmem:[%s8 + $0xa8] sm:$0xff]
  %v541 = vld [vmem:[%s8 + $0xb0] sm:$0xf]
  %v542 = vld [vmem:[%s8 + $0xb4] sm:$0xff]
  %v543 = vld [vmem:[%s8 + $0xbc] sm:$0xf]
  %v544 = vld [vmem:[%s9] sm:$0x7]
  %v545 = vld [vmem:[%s1] sm:$0xff]
  %v546 = vld [vmem:[#allocation2] sm:$0xff]
  %v547 = vld [vmem:[#allocation2 + $0x8] sm:$0xff]
  %v548 = vld [vmem:[#allocation2 + $0x10] sm:$0xff]
  %v549 = vpack.c.bf16 %v545, %v545
  %v551 = vperm.slane %v544, 0
  %v552 = vperm.slane %v544, 1
  %v553 = vperm.slane %v544, 2
  %v589 = vunpack.c.l.b16 %v512
  %v590 = vunpack.c.h.b16 %v512
  %v591 = vunpack.c.l.b16 %v513
  %v592 = vunpack.c.l.b16 %v514
  %v593 = vunpack.c.h.b16 %v514
  %v594 = vunpack.c.l.b16 %v515
  %v595 = vunpack.c.l.b16 %v516
  %v596 = vunpack.c.h.b16 %v516
  %v597 = vunpack.c.l.b16 %v517
  %v598 = vunpack.c.l.b16 %v518
  %v599 = vunpack.c.h.b16 %v518
  %v600 = vunpack.c.l.b16 %v519
  %v601 = vunpack.c.l.b16 %v520
  %v602 = vunpack.c.h.b16 %v520
  %v603 = vunpack.c.l.b16 %v521
  %v604 = vunpack.c.l.b16 %v522
  %v605 = vunpack.c.h.b16 %v522
  %v606 = vunpack.c.l.b16 %v523
  %v607 = vunpack.c.l.b16 %v524
  %v608 = vunpack.c.h.b16 %v524
  %v609 = vunpack.c.l.b16 %v525
  %v610 = vunpack.c.l.b16 %v526
  %v611 = vunpack.c.h.b16 %v526
  %v612 = vunpack.c.l.b16 %v527
  %v613 = vunpack.c.l.b16 %v528
  %v614 = vunpack.c.h.b16 %v528
  %v615 = vunpack.c.l.b16 %v529
  %v616 = vunpack.c.l.b16 %v530
  %v617 = vunpack.c.h.b16 %v530
  %v618 = vunpack.c.l.b16 %v531
  %v619 = vunpack.c.l.b16 %v532
  %v620 = vunpack.c.h.b16 %v532
  %v621 = vunpack.c.l.b16 %v533
  %v622 = vunpack.c.l.b16 %v534
  %v623 = vunpack.c.h.b16 %v534
  %v624 = vunpack.c.l.b16 %v535
  %v625 = vunpack.c.l.b16 %v536
  %v626 = vunpack.c.h.b16 %v536
  %v627 = vunpack.c.l.b16 %v537
  %v628 = vunpack.c.l.b16 %v538
  %v629 = vunpack.c.h.b16 %v538
  %v630 = vunpack.c.l.b16 %v539
  %v631 = vunpack.c.l.b16 %v540
  %v632 = vunpack.c.h.b16 %v540
  %v633 = vunpack.c.l.b16 %v541
  %v634 = vunpack.c.l.b16 %v542
  %v635 = vunpack.c.h.b16 %v542
  %v636 = vunpack.c.l.b16 %v543
  %v637 = vpack.c.b16 %v592, %v589
  %v638 = vpack.c.b16 %v593, %v590
  %v639 = vpack.c.b16 %v594, %v591
  %v640 = vpack.c.b16 %v598, %v595
  %v641 = vpack.c.b16 %v599, %v596
  %v642 = vpack.c.b16 %v600, %v597
  %v643 = vpack.c.b16 %v604, %v601
  %v644 = vpack.c.b16 %v605, %v602
  %v645 = vpack.c.b16 %v606, %v603
  %v646 = vpack.c.b16 %v610, %v607
  %v647 = vpack.c.b16 %v611, %v608
  %v648 = vpack.c.b16 %v612, %v609
  %v649 = vpack.c.b16 %v616, %v613
  %v650 = vpack.c.b16 %v617, %v614
  %v651 = vpack.c.b16 %v618, %v615
  %v652 = vpack.c.b16 %v622, %v619
  %v653 = vpack.c.b16 %v623, %v620
  %v654 = vpack.c.b16 %v624, %v621
  %v655 = vpack.c.b16 %v628, %v625
  %v656 = vpack.c.b16 %v629, %v626
  %v657 = vpack.c.b16 %v630, %v627
  %v658 = vpack.c.b16 %v634, %v631
  %v659 = vpack.c.b16 %v635, %v632
  %v660 = vpack.c.b16 %v636, %v633
  %685 = vmatpush.bf16.msra.mxu0 %v658
  %686 = vmatpush.bf16.msra.mxu0 %v655
  %687 = vmatpush.bf16.msra.mxu0 %v652
  %688 = vmatpush.bf16.msra.mxu0 %v649
  %689 = vmatpush.bf16.msra.mxu0 %v646
  %690 = vmatpush.bf16.msra.mxu0 %v643
  %691 = vmatpush.bf16.msra.mxu0 %v640
  %692 = vmatpush.bf16.msra.mxu0 %v637
  %693 = vmatmul.bf16.gmra.mxu0 %v549
  %v694 = vpop.f32.mrf.mxu0
  %v695 = vadd.f32 %v551, %v694
  %v696 = vpop.f32.mrf.mxu0
  %697 = vdwg.mxu0
  %698 = vmatpush.bf16.msra.mxu0 %v659
  %699 = vmatpush.bf16.msra.mxu0 %v656
  %700 = vmatpush.bf16.msra.mxu0 %v653
  %701 = vmatpush.bf16.msra.mxu0 %v650
  %702 = vmatpush.bf16.msra.mxu0 %v647
  %703 = vmatpush.bf16.msra.mxu0 %v644
  %704 = vmatpush.bf16.msra.mxu0 %v641
  %705 = vmatpush.bf16.msra.mxu0 %v638
  %706 = vmatmul.bf16.gmra.mxu0 %v549
  %v707 = vpop.f32.mrf.mxu0
  %v708 = vadd.f32 %v552, %v707
  %v709 = vpop.f32.mrf.mxu0
  %710 = vdwg.mxu0
  %711 = vmatpush.bf16.msra.mxu0 %v660
  %712 = vmatpush.bf16.msra.mxu0 %v657
  %713 = vmatpush.bf16.msra.mxu0 %v654
  %714 = vmatpush.bf16.msra.mxu0 %v651
  %715 = vmatpush.bf16.msra.mxu0 %v648
  %716 = vmatpush.bf16.msra.mxu0 %v645
  %717 = vmatpush.bf16.msra.mxu0 %v642
  %718 = vmatpush.bf16.msra.mxu0 %v639
  %719 = vmatmul.bf16.gmra.mxu0 %v549
  %v720 = vpop.f32.mrf.mxu0
  %v721 = vadd.f32 %v553, %v720
  %v722 = vpop.f32.mrf.mxu0
  %723 = vdwg.mxu0
  %v724 = vadd.f32 %v546, %v695
  %v725 = vxor.u32 %v724, 2147483648
  %v726 = vmul.f32 %v725, 1.442695
  %v727 = vpow.pop %v726
  %v728 = vadd.f32 %v727, 1.0
  %v729 = vrcp.pop %v728
  %v730 = vmul.f32 %v728, %v729
  %v731 = vsub.f32 1.0, %v730
  %v732 = vmul.f32 %v729, %v731
  %v733 = vadd.f32 %v729, %v732
  %vm734 = vweird.f32 %v728
  %vm735 = vweird.f32 %v729
  %vm736 = vmor %vm734, %vm735
  %v737 = vsel %vm736, %v729, %v733
  %v738 = vand.u32 2147483647, %v728
  %vm739 = vcmp.eq.f32.partialorder %v738, 8.507059e+37
  %v740 = vand.u32 %v728, 2147483648
  %v741 = vor.u32 1.1754944e-38, %v740
  %v742 = vsel %vm739, %v741, %v737
  %v743 = vmul.f32 1.0, %v742
  %v744 = vadd.f32 %v547, %v708
  %v745 = vxor.u32 %v744, 2147483648
  %v746 = vmul.f32 %v745, 1.442695
  %v747 = vpow.pop %v746
  %v748 = vadd.f32 %v747, 1.0
  %v749 = vrcp.pop %v748
  %v750 = vmul.f32 %v748, %v749
  %v751 = vsub.f32 1.0, %v750
  %v752 = vmul.f32 %v749, %v751
  %v753 = vadd.f32 %v749, %v752
  %vm754 = vweird.f32 %v748
  %vm755 = vweird.f32 %v749
  %vm756 = vmor %vm754, %vm755
  %v757 = vsel %vm756, %v749, %v753
  %v758 = vand.u32 2147483647, %v748
  %vm759 = vcmp.eq.f32.partialorder %v758, 8.507059e+37
  %v760 = vand.u32 %v748, 2147483648
  %v761 = vor.u32 1.1754944e-38, %v760
  %v762 = vsel %vm759, %v761, %v757
  %v763 = vmul.f32 1.0, %v762
  %v764 = vmul.f32 %v743, %v721
  %v765 = vadd.f32 %v548, %v764
  %v766 = vtanh.pop %v765
  %v767 = vsub.f32 1.0, %v763
  %v768 = vmul.f32 %v767, %v766
  %v769 = vmul.f32 %v763, %v545
  %v770 = vadd.f32 %v768, %v769
  %771 = vst [vmem:[%s14] sm:$0xff] %v770
  %s772 = scalar_lea.vmem [#allocation2], 24
  %v773 = vld [vmem:[%s772] sm:$0xff]
  %v774 = vld [vmem:[%s772 + $0x8] sm:$0xff]
  %v775 = vld [vmem:[%s772 + $0x10] sm:$0xff]
  %v776 = vpack.c.bf16 %v770, %v770
  %777 = vmatpush.bf16.msra.mxu0 %v658
  %778 = vmatpush.bf16.msra.mxu0 %v655
  %779 = vmatpush.bf16.msra.mxu0 %v652
  %780 = vmatpush.bf16.msra.mxu0 %v649
  %781 = vmatpush.bf16.msra.mxu0 %v646
  %782 = vmatpush.bf16.msra.mxu0 %v643
  %783 = vmatpush.bf16.msra.mxu0 %v640
  %784 = vmatpush.bf16.msra.mxu0 %v637
  %785 = vmatmul.bf16.gmra.mxu0 %v776
  %v786 = vpop.f32.mrf.mxu0
  %v787 = vadd.f32 %v551, %v786
  %v788 = vpop.f32.mrf.mxu0
  %789 = vdwg.mxu0
  %790 = vmatpush.bf16.msra.mxu0 %v659
  %791 = vmatpush.bf16.msra.mxu0 %v656
  %792 = vmatpush.bf16.msra.mxu0 %v653
  %793 = vmatpush.bf16.msra.mxu0 %v650
  %794 = vmatpush.bf16.msra.mxu0 %v647
  %795 = vmatpush.bf16.msra.mxu0 %v644
  %796 = vmatpush.bf16.msra.mxu0 %v641
  %797 = vmatpush.bf16.msra.mxu0 %v638
  %798 = vmatmul.bf16.gmra.mxu0 %v776
  %v799 = vpop.f32.mrf.mxu0
  %v800 = vadd.f32 %v552, %v799
  %v801 = vpop.f32.mrf.mxu0
  %802 = vdwg.mxu0
  %803 = vmatpush.bf16.msra.mxu0 %v660
  %804 = vmatpush.bf16.msra.mxu0 %v657
  %805 = vmatpush.bf16.msra.mxu0 %v654
  %806 = vmatpush.bf16.msra.mxu0 %v651
  %807 = vmatpush.bf16.msra.mxu0 %v648
  %808 = vmatpush.bf16.msra.mxu0 %v645
  %809 = vmatpush.bf16.msra.mxu0 %v642
  %810 = vmatpush.bf16.msra.mxu0 %v639
  %811 = vmatmul.bf16.gmra.mxu0 %v776
  %v812 = vpop.f32.mrf.mxu0
  %v813 = vadd.f32 %v553, %v812
  %v814 = vpop.f32.mrf.mxu0
  %815 = vdwg.mxu0
  %v816 = vadd.f32 %v773, %v787
  %v817 = vxor.u32 %v816, 2147483648
  %v818 = vmul.f32 %v817, 1.442695
  %v819 = vpow.pop %v818
  %v820 = vadd.f32 %v819, 1.0
  %v821 = vrcp.pop %v820
  %v822 = vmul.f32 %v820, %v821
  %v823 = vsub.f32 1.0, %v822
  %v824 = vmul.f32 %v821, %v823
  %v825 = vadd.f32 %v821, %v824
  %vm826 = vweird.f32 %v820
  %vm827 = vweird.f32 %v821
  %vm828 = vmor %vm826, %vm827
  %v829 = vsel %vm828, %v821, %v825
  %v830 = vand.u32 2147483647, %v820
  %vm831 = vcmp.eq.f32.partialorder %v830, 8.507059e+37
  %v832 = vand.u32 %v820, 2147483648
  %v833 = vor.u32 1.1754944e-38, %v832
  %v834 = vsel %vm831, %v833, %v829
  %v835 = vmul.f32 1.0, %v834
  %v836 = vadd.f32 %v774, %v800
  %v837 = vxor.u32 %v836, 2147483648
  %v838 = vmul.f32 %v837, 1.442695
  %v839 = vpow.pop %v838
  %v840 = vadd.f32 %v839, 1.0
  %v841 = vrcp.pop %v840
  %v842 = vmul.f32 %v840, %v841
  %v843 = vsub.f32 1.0, %v842
  %v844 = vmul.f32 %v841, %v843
  %v845 = vadd.f32 %v841, %v844
  %vm846 = vweird.f32 %v840
  %vm847 = vweird.f32 %v841
  %vm848 = vmor %vm846, %vm847
  %v849 = vsel %vm848, %v841, %v845
  %v850 = vand.u32 2147483647, %v840
  %vm851 = vcmp.eq.f32.partialorder %v850, 8.507059e+37
  %v852 = vand.u32 %v840, 2147483648
  %v853 = vor.u32 1.1754944e-38, %v852
  %v854 = vsel %vm851, %v853, %v849
  %v855 = vmul.f32 1.0, %v854
  %v856 = vmul.f32 %v835, %v813
  %v857 = vadd.f32 %v775, %v856
  %v858 = vtanh.pop %v857
  %v859 = vsub.f32 1.0, %v855
  %v860 = vmul.f32 %v859, %v858
  %v861 = vmul.f32 %v855, %v770
  %v862 = vadd.f32 %v860, %v861
  %s863 = scalar_lea.vmem %s14, 8
  %864 = vst [vmem:[%s863] sm:$0xff] %v862
  %s865 = scalar_lea.vmem [#allocation2], 48
  %v866 = vld [vmem:[%s865] sm:$0xff]
  %v867 = vld [vmem:[%s865 + $0x8] sm:$0xff]
  %v868 = vld [vmem:[%s865 + $0x10] sm:$0xff]
  %v869 = vpack.c.bf16 %v862, %v862
  %870 = vmatpush.bf16.msra.mxu0 %v658
  %871 = vmatpush.bf16.msra.mxu0 %v655
  %872 = vmatpush.bf16.msra.mxu0 %v652
  %873 = vmatpush.bf16.msra.mxu0 %v649
  %874 = vmatpush.bf16.msra.mxu0 %v646
  %875 = vmatpush.bf16.msra.mxu0 %v643
  %876 = vmatpush.bf16.msra.mxu0 %v640
  %877 = vmatpush.bf16.msra.mxu0 %v637
  %878 = vmatmul.bf16.gmra.mxu0 %v869
  %v879 = vpop.f32.mrf.mxu0
  %v880 = vadd.f32 %v551, %v879
  %v881 = vpop.f32.mrf.mxu0
  %882 = vdwg.mxu0
  %883 = vmatpush.bf16.msra.mxu0 %v659
  %884 = vmatpush.bf16.msra.mxu0 %v656
  %885 = vmatpush.bf16.msra.mxu0 %v653
  %886 = vmatpush.bf16.msra.mxu0 %v650
  %887 = vmatpush.bf16.msra.mxu0 %v647
  %888 = vmatpush.bf16.msra.mxu0 %v644
  %889 = vmatpush.bf16.msra.mxu0 %v641
  %890 = vmatpush.bf16.msra.mxu0 %v638
  %891 = vmatmul.bf16.gmra.mxu0 %v869
  %v892 = vpop.f32.mrf.mxu0
  %v893 = vadd.f32 %v552, %v892
  %v894 = vpop.f32.mrf.mxu0
  %895 = vdwg.mxu0
  %896 = vmatpush.bf16.msra.mxu0 %v660
  %897 = vmatpush.bf16.msra.mxu0 %v657
  %898 = vmatpush.bf16.msra.mxu0 %v654
  %899 = vmatpush.bf16.msra.mxu0 %v651
  %900 = vmatpush.bf16.msra.mxu0 %v648
  %901 = vmatpush.bf16.msra.mxu0 %v645
  %902 = vmatpush.bf16.msra.mxu0 %v642
  %903 = vmatpush.bf16.msra.mxu0 %v639
  %904 = vmatmul.bf16.gmra.mxu0 %v869
  %v905 = vpop.f32.mrf.mxu0
  %v906 = vadd.f32 %v553, %v905
  %v907 = vpop.f32.mrf.mxu0
  %908 = vdwg.mxu0
  %v909 = vadd.f32 %v866, %v880
  %v910 = vxor.u32 %v909, 2147483648
  %v911 = vmul.f32 %v910, 1.442695
  %v912 = vpow.pop %v911
  %v913 = vadd.f32 %v912, 1.0
  %v914 = vrcp.pop %v913
  %v915 = vmul.f32 %v913, %v914
  %v916 = vsub.f32 1.0, %v915
  %v917 = vmul.f32 %v914, %v916
  %v918 = vadd.f32 %v914, %v917
  %vm919 = vweird.f32 %v913
  %vm920 = vweird.f32 %v914
  %vm921 = vmor %vm919, %vm920
  %v922 = vsel %vm921, %v914, %v918
  %v923 = vand.u32 2147483647, %v913
  %vm924 = vcmp.eq.f32.partialorder %v923, 8.507059e+37
  %v925 = vand.u32 %v913, 2147483648
  %v926 = vor.u32 1.1754944e-38, %v925
  %v927 = vsel %vm924, %v926, %v922
  %v928 = vmul.f32 1.0, %v927
  %v929 = vadd.f32 %v867, %v893
  %v930 = vxor.u32 %v929, 2147483648
  %v931 = vmul.f32 %v930, 1.442695
  %v932 = vpow.pop %v931
  %v933 = vadd.f32 %v932, 1.0
  %v934 = vrcp.pop %v933
  %v935 = vmul.f32 %v933, %v934
  %v936 = vsub.f32 1.0, %v935
  %v937 = vmul.f32 %v934, %v936
  %v938 = vadd.f32 %v934, %v937
  %vm939 = vweird.f32 %v933
  %vm940 = vweird.f32 %v934
  %vm941 = vmor %vm939, %vm940
  %v942 = vsel %vm941, %v934, %v938
  %v943 = vand.u32 2147483647, %v933
  %vm944 = vcmp.eq.f32.partialorder %v943, 8.507059e+37
  %v945 = vand.u32 %v933, 2147483648
  %v946 = vor.u32 1.1754944e-38, %v945
  %v947 = vsel %vm944, %v946, %v942
  %v948 = vmul.f32 1.0, %v947
  %v949 = vmul.f32 %v928, %v906
  %v950 = vadd.f32 %v868, %v949
  %v951 = vtanh.pop %v950
  %v952 = vsub.f32 1.0, %v948
  %v953 = vmul.f32 %v952, %v951
  %v954 = vmul.f32 %v948, %v862
  %v955 = vadd.f32 %v953, %v954
  %s956 = scalar_lea.vmem %s14, 16
  %957 = vst [vmem:[%s956] sm:$0xff] %v955
  %s958 = scalar_lea.vmem [#allocation2], 72
  %v959 = vld [vmem:[%s958] sm:$0xff]
  %v960 = vld [vmem:[%s958 + $0x8] sm:$0xff]
  %v961 = vld [vmem:[%s958 + $0x10] sm:$0xff]
  %v962 = vpack.c.bf16 %v955, %v955
  %963 = vmatpush.bf16.msra.mxu0 %v658
  %964 = vmatpush.bf16.msra.mxu0 %v655
  %965 = vmatpush.bf16.msra.mxu0 %v652
  %966 = vmatpush.bf16.msra.mxu0 %v649
  %967 = vmatpush.bf16.msra.mxu0 %v646
  %968 = vmatpush.bf16.msra.mxu0 %v643
  %969 = vmatpush.bf16.msra.mxu0 %v640
  %970 = vmatpush.bf16.msra.mxu0 %v637
  %971 = vmatmul.bf16.gmra.mxu0 %v962
  %v972 = vpop.f32.mrf.mxu0
  %v973 = vadd.f32 %v551, %v972
  %v974 = vpop.f32.mrf.mxu0
  %975 = vdwg.mxu0
  %976 = vmatpush.bf16.msra.mxu0 %v659
  %977 = vmatpush.bf16.msra.mxu0 %v656
  %978 = vmatpush.bf16.msra.mxu0 %v653
  %979 = vmatpush.bf16.msra.mxu0 %v650
  %980 = vmatpush.bf16.msra.mxu0 %v647
  %981 = vmatpush.bf16.msra.mxu0 %v644
  %982 = vmatpush.bf16.msra.mxu0 %v641
  %983 = vmatpush.bf16.msra.mxu0 %v638
  %984 = vmatmul.bf16.gmra.mxu0 %v962
  %v985 = vpop.f32.mrf.mxu0
  %v986 = vadd.f32 %v552, %v985
  %v987 = vpop.f32.mrf.mxu0
  %988 = vdwg.mxu0
  %989 = vmatpush.bf16.msra.mxu0 %v660
  %990 = vmatpush.bf16.msra.mxu0 %v657
  %991 = vmatpush.bf16.msra.mxu0 %v654
  %992 = vmatpush.bf16.msra.mxu0 %v651
  %993 = vmatpush.bf16.msra.mxu0 %v648
  %994 = vmatpush.bf16.msra.mxu0 %v645
  %995 = vmatpush.bf16.msra.mxu0 %v642
  %996 = vmatpush.bf16.msra.mxu0 %v639
  %997 = vmatmul.bf16.gmra.mxu0 %v962
  %v998 = vpop.f32.mrf.mxu0
  %v999 = vadd.f32 %v553, %v998
  %v1000 = vpop.f32.mrf.mxu0
  %1001 = vdwg.mxu0
  %v1002 = vadd.f32 %v959, %v973
  %v1003 = vxor.u32 %v1002, 2147483648
  %v1004 = vmul.f32 %v1003, 1.442695
  %v1005 = vpow.pop %v1004
  %v1006 = vadd.f32 %v1005, 1.0
  %v1007 = vrcp.pop %v1006
  %v1008 = vmul.f32 %v1006, %v1007
  %v1009 = vsub.f32 1.0, %v1008
  %v1010 = vmul.f32 %v1007, %v1009
  %v1011 = vadd.f32 %v1007, %v1010
  %vm1012 = vweird.f32 %v1006
  %vm1013 = vweird.f32 %v1007
  %vm1014 = vmor %vm1012, %vm1013
  %v1015 = vsel %vm1014, %v1007, %v1011
  %v1016 = vand.u32 2147483647, %v1006
  %vm1017 = vcmp.eq.f32.partialorder %v1016, 8.507059e+37
  %v1018 = vand.u32 %v1006, 2147483648
  %v1019 = vor.u32 1.1754944e-38, %v1018
  %v1020 = vsel %vm1017, %v1019, %v1015
  %v1021 = vmul.f32 1.0, %v1020
  %v1022 = vadd.f32 %v960, %v986
  %v1023 = vxor.u32 %v1022, 2147483648
  %v1024 = vmul.f32 %v1023, 1.442695
  %v1025 = vpow.pop %v1024
  %v1026 = vadd.f32 %v1025, 1.0
  %v1027 = vrcp.pop %v1026
  %v1028 = vmul.f32 %v1026, %v1027
  %v1029 = vsub.f32 1.0, %v1028
  %v1030 = vmul.f32 %v1027, %v1029
  %v1031 = vadd.f32 %v1027, %v1030
  %vm1032 = vweird.f32 %v1026
  %vm1033 = vweird.f32 %v1027
  %vm1034 = vmor %vm1032, %vm1033
  %v1035 = vsel %vm1034, %v1027, %v1031
  %v1036 = vand.u32 2147483647, %v1026
  %vm1037 = vcmp.eq.f32.partialorder %v1036, 8.507059e+37
  %v1038 = vand.u32 %v1026, 2147483648
  %v1039 = vor.u32 1.1754944e-38, %v1038
  %v1040 = vsel %vm1037, %v1039, %v1035
  %v1041 = vmul.f32 1.0, %v1040
  %v1042 = vmul.f32 %v1021, %v999
  %v1043 = vadd.f32 %v961, %v1042
  %v1044 = vtanh.pop %v1043
  %v1045 = vsub.f32 1.0, %v1041
  %v1046 = vmul.f32 %v1045, %v1044
  %v1047 = vmul.f32 %v1041, %v955
  %v1048 = vadd.f32 %v1046, %v1047
  %s1049 = scalar_lea.vmem %s14, 24
  %1050 = vst [vmem:[%s1049] sm:$0xff] %v1048
  %s1051 = scalar_lea.vmem [#allocation2], 96
  %v1052 = vld [vmem:[%s1051] sm:$0xff]
  %v1053 = vld [vmem:[%s1051 + $0x8] sm:$0xff]
  %v1054 = vld [vmem:[%s1051 + $0x10] sm:$0xff]
  %v1055 = vpack.c.bf16 %v1048, %v1048
  %1056 = vmatpush.bf16.msra.mxu0 %v658
  %1057 = vmatpush.bf16.msra.mxu0 %v655
  %1058 = vmatpush.bf16.msra.mxu0 %v652
  %1059 = vmatpush.bf16.msra.mxu0 %v649
  %1060 = vmatpush.bf16.msra.mxu0 %v646
  %1061 = vmatpush.bf16.msra.mxu0 %v643
  %1062 = vmatpush.bf16.msra.mxu0 %v640
  %1063 = vmatpush.bf16.msra.mxu0 %v637
  %1064 = vmatmul.bf16.gmra.mxu0 %v1055
  %v1065 = vpop.f32.mrf.mxu0
  %v1066 = vadd.f32 %v551, %v1065
  %v1067 = vpop.f32.mrf.mxu0
  %1068 = vdwg.mxu0
  %1069 = vmatpush.bf16.msra.mxu0 %v659
  %1070 = vmatpush.bf16.msra.mxu0 %v656
  %1071 = vmatpush.bf16.msra.mxu0 %v653
  %1072 = vmatpush.bf16.msra.mxu0 %v650
  %1073 = vmatpush.bf16.msra.mxu0 %v647
  %1074 = vmatpush.bf16.msra.mxu0 %v644
  %1075 = vmatpush.bf16.msra.mxu0 %v641
  %1076 = vmatpush.bf16.msra.mxu0 %v638
  %1077 = vmatmul.bf16.gmra.mxu0 %v1055
  %v1078 = vpop.f32.mrf.mxu0
  %v1079 = vadd.f32 %v552, %v1078
  %v1080 = vpop.f32.mrf.mxu0
  %1081 = vdwg.mxu0
  %1082 = vmatpush.bf16.msra.mxu0 %v660
  %1083 = vmatpush.bf16.msra.mxu0 %v657
  %1084 = vmatpush.bf16.msra.mxu0 %v654
  %1085 = vmatpush.bf16.msra.mxu0 %v651
  %1086 = vmatpush.bf16.msra.mxu0 %v648
  %1087 = vmatpush.bf16.msra.mxu0 %v645
  %1088 = vmatpush.bf16.msra.mxu0 %v642
  %1089 = vmatpush.bf16.msra.mxu0 %v639
  %1090 = vmatmul.bf16.gmra.mxu0 %v1055
  %v1091 = vpop.f32.mrf.mxu0
  %v1092 = vadd.f32 %v553, %v1091
  %v1093 = vpop.f32.mrf.mxu0
  %1094 = vdwg.mxu0
  %v1095 = vadd.f32 %v1052, %v1066
  %v1096 = vxor.u32 %v1095, 2147483648
  %v1097 = vmul.f32 %v1096, 1.442695
  %v1098 = vpow.pop %v1097
  %v1099 = vadd.f32 %v1098, 1.0
  %v1100 = vrcp.pop %v1099
  %v1101 = vmul.f32 %v1099, %v1100
  %v1102 = vsub.f32 1.0, %v1101
  %v1103 = vmul.f32 %v1100, %v1102
  %v1104 = vadd.f32 %v1100, %v1103
  %vm1105 = vweird.f32 %v1099
  %vm1106 = vweird.f32 %v1100
  %vm1107 = vmor %vm1105, %vm1106
  %v1108 = vsel %vm1107, %v1100, %v1104
  %v1109 = vand.u32 2147483647, %v1099
  %vm1110 = vcmp.eq.f32.partialorder %v1109, 8.507059e+37
  %v1111 = vand.u32 %v1099, 2147483648
  %v1112 = vor.u32 1.1754944e-38, %v1111
  %v1113 = vsel %vm1110, %v1112, %v1108
  %v1114 = vmul.f32 1.0, %v1113
  %v1115 = vadd.f32 %v1053, %v1079
  %v1116 = vxor.u32 %v1115, 2147483648
  %v1117 = vmul.f32 %v1116, 1.442695
  %v1118 = vpow.pop %v1117
  %v1119 = vadd.f32 %v1118, 1.0
  %v1120 = vrcp.pop %v1119
  %v1121 = vmul.f32 %v1119, %v1120
  %v1122 = vsub.f32 1.0, %v1121
  %v1123 = vmul.f32 %v1120, %v1122
  %v1124 = vadd.f32 %v1120, %v1123
  %vm1125 = vweird.f32 %v1119
  %vm1126 = vweird.f32 %v1120
  %vm1127 = vmor %vm1125, %vm1126
  %v1128 = vsel %vm1127, %v1120, %v1124
  %v1129 = vand.u32 2147483647, %v1119
  %vm1130 = vcmp.eq.f32.partialorder %v1129, 8.507059e+37
  %v1131 = vand.u32 %v1119, 2147483648
  %v1132 = vor.u32 1.1754944e-38, %v1131
  %v1133 = vsel %vm1130, %v1132, %v1128
  %v1134 = vmul.f32 1.0, %v1133
  %v1135 = vmul.f32 %v1114, %v1092
  %v1136 = vadd.f32 %v1054, %v1135
  %v1137 = vtanh.pop %v1136
  %v1138 = vsub.f32 1.0, %v1134
  %v1139 = vmul.f32 %v1138, %v1137
  %v1140 = vmul.f32 %v1134, %v1048
  %v1141 = vadd.f32 %v1139, %v1140
  %s1142 = scalar_lea.vmem %s14, 32
  %1143 = vst [vmem:[%s1142] sm:$0xff] %v1141
  %s1144 = scalar_lea.vmem [#allocation2], 120
  %v1145 = vld [vmem:[%s1144] sm:$0xff]
  %v1146 = vld [vmem:[%s1144 + $0x8] sm:$0xff]
  %v1147 = vld [vmem:[%s1144 + $0x10] sm:$0xff]
  %v1148 = vpack.c.bf16 %v1141, %v1141
  %1149 = vmatpush.bf16.msra.mxu0 %v658
  %1150 = vmatpush.bf16.msra.mxu0 %v655
  %1151 = vmatpush.bf16.msra.mxu0 %v652
  %1152 = vmatpush.bf16.msra.mxu0 %v649
  %1153 = vmatpush.bf16.msra.mxu0 %v646
  %1154 = vmatpush.bf16.msra.mxu0 %v643
  %1155 = vmatpush.bf16.msra.mxu0 %v640
  %1156 = vmatpush.bf16.msra.mxu0 %v637
  %1157 = vmatmul.bf16.gmra.mxu0 %v1148
  %v1158 = vpop.f32.mrf.mxu0
  %v1159 = vadd.f32 %v551, %v1158
  %v1160 = vpop.f32.mrf.mxu0
  %1161 = vdwg.mxu0
  %1162 = vmatpush.bf16.msra.mxu0 %v659
  %1163 = vmatpush.bf16.msra.mxu0 %v656
  %1164 = vmatpush.bf16.msra.mxu0 %v653
  %1165 = vmatpush.bf16.msra.mxu0 %v650
  %1166 = vmatpush.bf16.msra.mxu0 %v647
  %1167 = vmatpush.bf16.msra.mxu0 %v644
  %1168 = vmatpush.bf16.msra.mxu0 %v641
  %1169 = vmatpush.bf16.msra.mxu0 %v638
  %1170 = vmatmul.bf16.gmra.mxu0 %v1148
  %v1171 = vpop.f32.mrf.mxu0
  %v1172 = vadd.f32 %v552, %v1171
  %v1173 = vpop.f32.mrf.mxu0
  %1174 = vdwg.mxu0
  %1175 = vmatpush.bf16.msra.mxu0 %v660
  %1176 = vmatpush.bf16.msra.mxu0 %v657
  %1177 = vmatpush.bf16.msra.mxu0 %v654
  %1178 = vmatpush.bf16.msra.mxu0 %v651
  %1179 = vmatpush.bf16.msra.mxu0 %v648
  %1180 = vmatpush.bf16.msra.mxu0 %v645
  %1181 = vmatpush.bf16.msra.mxu0 %v642
  %1182 = vmatpush.bf16.msra.mxu0 %v639
  %1183 = vmatmul.bf16.gmra.mxu0 %v1148
  %v1184 = vpop.f32.mrf.mxu0
  %v1185 = vadd.f32 %v553, %v1184
  %v1186 = vpop.f32.mrf.mxu0
  %1187 = vdwg.mxu0
  %v1188 = vadd.f32 %v1145, %v1159
  %v1189 = vxor.u32 %v1188, 2147483648
  %v1190 = vmul.f32 %v1189, 1.442695
  %v1191 = vpow.pop %v1190
  %v1192 = vadd.f32 %v1191, 1.0
  %v1193 = vrcp.pop %v1192
  %v1194 = vmul.f32 %v1192, %v1193
  %v1195 = vsub.f32 1.0, %v1194
  %v1196 = vmul.f32 %v1193, %v1195
  %v1197 = vadd.f32 %v1193, %v1196
  %vm1198 = vweird.f32 %v1192
  %vm1199 = vweird.f32 %v1193
  %vm1200 = vmor %vm1198, %vm1199
  %v1201 = vsel %vm1200, %v1193, %v1197
  %v1202 = vand.u32 2147483647, %v1192
  %vm1203 = vcmp.eq.f32.partialorder %v1202, 8.507059e+37
  %v1204 = vand.u32 %v1192, 2147483648
  %v1205 = vor.u32 1.1754944e-38, %v1204
  %v1206 = vsel %vm1203, %v1205, %v1201
  %v1207 = vmul.f32 1.0, %v1206
  %v1208 = vadd.f32 %v1146, %v1172
  %v1209 = vxor.u32 %v1208, 2147483648
  %v1210 = vmul.f32 %v1209, 1.442695
  %v1211 = vpow.pop %v1210
  %v1212 = vadd.f32 %v1211, 1.0
  %v1213 = vrcp.pop %v1212
  %v1214 = vmul.f32 %v1212, %v1213
  %v1215 = vsub.f32 1.0, %v1214
  %v1216 = vmul.f32 %v1213, %v1215
  %v1217 = vadd.f32 %v1213, %v1216
  %vm1218 = vweird.f32 %v1212
  %vm1219 = vweird.f32 %v1213
  %vm1220 = vmor %vm1218, %vm1219
  %v1221 = vsel %vm1220, %v1213, %v1217
  %v1222 = vand.u32 2147483647, %v1212
  %vm1223 = vcmp.eq.f32.partialorder %v1222, 8.507059e+37
  %v1224 = vand.u32 %v1212, 2147483648
  %v1225 = vor.u32 1.1754944e-38, %v1224
  %v1226 = vsel %vm1223, %v1225, %v1221
  %v1227 = vmul.f32 1.0, %v1226
  %v1228 = vmul.f32 %v1207, %v1185
  %v1229 = vadd.f32 %v1147, %v1228
  %v1230 = vtanh.pop %v1229
  %v1231 = vsub.f32 1.0, %v1227
  %v1232 = vmul.f32 %v1231, %v1230
  %v1233 = vmul.f32 %v1227, %v1141
  %v1234 = vadd.f32 %v1232, %v1233
  %s1235 = scalar_lea.vmem %s14, 40
  %1236 = vst [vmem:[%s1235] sm:$0xff] %v1234
  %s1237 = scalar_lea.vmem [#allocation2], 144
  %v1238 = vld [vmem:[%s1237] sm:$0xff]
  %v1239 = vld [vmem:[%s1237 + $0x8] sm:$0xff]
  %v1240 = vld [vmem:[%s1237 + $0x10] sm:$0xff]
  %v1241 = vpack.c.bf16 %v1234, %v1234
  %1242 = vmatpush.bf16.msra.mxu0 %v658
  %1243 = vmatpush.bf16.msra.mxu0 %v655
  %1244 = vmatpush.bf16.msra.mxu0 %v652
  %1245 = vmatpush.bf16.msra.mxu0 %v649
  %1246 = vmatpush.bf16.msra.mxu0 %v646
  %1247 = vmatpush.bf16.msra.mxu0 %v643
  %1248 = vmatpush.bf16.msra.mxu0 %v640
  %1249 = vmatpush.bf16.msra.mxu0 %v637
  %1250 = vmatmul.bf16.gmra.mxu0 %v1241
  %v1251 = vpop.f32.mrf.mxu0
  %v1252 = vadd.f32 %v551, %v1251
  %v1253 = vpop.f32.mrf.mxu0
  %1254 = vdwg.mxu0
  %1255 = vmatpush.bf16.msra.mxu0 %v659
  %1256 = vmatpush.bf16.msra.mxu0 %v656
  %1257 = vmatpush.bf16.msra.mxu0 %v653
  %1258 = vmatpush.bf16.msra.mxu0 %v650
  %1259 = vmatpush.bf16.msra.mxu0 %v647
  %1260 = vmatpush.bf16.msra.mxu0 %v644
  %1261 = vmatpush.bf16.msra.mxu0 %v641
  %1262 = vmatpush.bf16.msra.mxu0 %v638
  %1263 = vmatmul.bf16.gmra.mxu0 %v1241
  %v1264 = vpop.f32.mrf.mxu0
  %v1265 = vadd.f32 %v552, %v1264
  %v1266 = vpop.f32.mrf.mxu0
  %1267 = vdwg.mxu0
  %1268 = vmatpush.bf16.msra.mxu0 %v660
  %1269 = vmatpush.bf16.msra.mxu0 %v657
  %1270 = vmatpush.bf16.msra.mxu0 %v654
  %1271 = vmatpush.bf16.msra.mxu0 %v651
  %1272 = vmatpush.bf16.msra.mxu0 %v648
  %1273 = vmatpush.bf16.msra.mxu0 %v645
  %1274 = vmatpush.bf16.msra.mxu0 %v642
  %1275 = vmatpush.bf16.msra.mxu0 %v639
  %1276 = vmatmul.bf16.gmra.mxu0 %v1241
  %v1277 = vpop.f32.mrf.mxu0
  %v1278 = vadd.f32 %v553, %v1277
  %v1279 = vpop.f32.mrf.mxu0
  %1280 = vdwg.mxu0
  %v1281 = vadd.f32 %v1238, %v1252
  %v1282 = vxor.u32 %v1281, 2147483648
  %v1283 = vmul.f32 %v1282, 1.442695
  %v1284 = vpow.pop %v1283
  %v1285 = vadd.f32 %v1284, 1.0
  %v1286 = vrcp.pop %v1285
  %v1287 = vmul.f32 %v1285, %v1286
  %v1288 = vsub.f32 1.0, %v1287
  %v1289 = vmul.f32 %v1286, %v1288
  %v1290 = vadd.f32 %v1286, %v1289
  %vm1291 = vweird.f32 %v1285
  %vm1292 = vweird.f32 %v1286
  %vm1293 = vmor %vm1291, %vm1292
  %v1294 = vsel %vm1293, %v1286, %v1290
  %v1295 = vand.u32 2147483647, %v1285
  %vm1296 = vcmp.eq.f32.partialorder %v1295, 8.507059e+37
  %v1297 = vand.u32 %v1285, 2147483648
  %v1298 = vor.u32 1.1754944e-38, %v1297
  %v1299 = vsel %vm1296, %v1298, %v1294
  %v1300 = vmul.f32 1.0, %v1299
  %v1301 = vadd.f32 %v1239, %v1265
  %v1302 = vxor.u32 %v1301, 2147483648
  %v1303 = vmul.f32 %v1302, 1.442695
  %v1304 = vpow.pop %v1303
  %v1305 = vadd.f32 %v1304, 1.0
  %v1306 = vrcp.pop %v1305
  %v1307 = vmul.f32 %v1305, %v1306
  %v1308 = vsub.f32 1.0, %v1307
  %v1309 = vmul.f32 %v1306, %v1308
  %v1310 = vadd.f32 %v1306, %v1309
  %vm1311 = vweird.f32 %v1305
  %vm1312 = vweird.f32 %v1306
  %vm1313 = vmor %vm1311, %vm1312
  %v1314 = vsel %vm1313, %v1306, %v1310
  %v1315 = vand.u32 2147483647, %v1305
  %vm1316 = vcmp.eq.f32.partialorder %v1315, 8.507059e+37
  %v1317 = vand.u32 %v1305, 2147483648
  %v1318 = vor.u32 1.1754944e-38, %v1317
  %v1319 = vsel %vm1316, %v1318, %v1314
  %v1320 = vmul.f32 1.0, %v1319
  %v1321 = vmul.f32 %v1300, %v1278
  %v1322 = vadd.f32 %v1240, %v1321
  %v1323 = vtanh.pop %v1322
  %v1324 = vsub.f32 1.0, %v1320
  %v1325 = vmul.f32 %v1324, %v1323
  %v1326 = vmul.f32 %v1320, %v1234
  %v1327 = vadd.f32 %v1325, %v1326
  %s1328 = scalar_lea.vmem %s14, 48
  %1329 = vst [vmem:[%s1328] sm:$0xff] %v1327
  %s1330 = scalar_lea.vmem [#allocation2], 168
  %v1331 = vld [vmem:[%s1330] sm:$0xff]
  %v1332 = vld [vmem:[%s1330 + $0x8] sm:$0xff]
  %v1333 = vld [vmem:[%s1330 + $0x10] sm:$0xff]
  %v1334 = vpack.c.bf16 %v1327, %v1327
  %1335 = vmatpush.bf16.msra.mxu0 %v658
  %1336 = vmatpush.bf16.msra.mxu0 %v655
  %1337 = vmatpush.bf16.msra.mxu0 %v652
  %1338 = vmatpush.bf16.msra.mxu0 %v649
  %1339 = vmatpush.bf16.msra.mxu0 %v646
  %1340 = vmatpush.bf16.msra.mxu0 %v643
  %1341 = vmatpush.bf16.msra.mxu0 %v640
  %1342 = vmatpush.bf16.msra.mxu0 %v637
  %1343 = vmatmul.bf16.gmra.mxu0 %v1334
  %v1344 = vpop.f32.mrf.mxu0
  %v1345 = vadd.f32 %v551, %v1344
  %v1346 = vpop.f32.mrf.mxu0
  %1347 = vdwg.mxu0
  %1348 = vmatpush.bf16.msra.mxu0 %v659
  %1349 = vmatpush.bf16.msra.mxu0 %v656
  %1350 = vmatpush.bf16.msra.mxu0 %v653
  %1351 = vmatpush.bf16.msra.mxu0 %v650
  %1352 = vmatpush.bf16.msra.mxu0 %v647
  %1353 = vmatpush.bf16.msra.mxu0 %v644
  %1354 = vmatpush.bf16.msra.mxu0 %v641
  %1355 = vmatpush.bf16.msra.mxu0 %v638
  %1356 = vmatmul.bf16.gmra.mxu0 %v1334
  %v1357 = vpop.f32.mrf.mxu0
  %v1358 = vadd.f32 %v552, %v1357
  %v1359 = vpop.f32.mrf.mxu0
  %1360 = vdwg.mxu0
  %1361 = vmatpush.bf16.msra.mxu0 %v660
  %1362 = vmatpush.bf16.msra.mxu0 %v657
  %1363 = vmatpush.bf16.msra.mxu0 %v654
  %1364 = vmatpush.bf16.msra.mxu0 %v651
  %1365 = vmatpush.bf16.msra.mxu0 %v648
  %1366 = vmatpush.bf16.msra.mxu0 %v645
  %1367 = vmatpush.bf16.msra.mxu0 %v642
  %1368 = vmatpush.bf16.msra.mxu0 %v639
  %1369 = vmatmul.bf16.gmra.mxu0 %v1334
  %v1370 = vpop.f32.mrf.mxu0
  %v1371 = vadd.f32 %v553, %v1370
  %v1372 = vpop.f32.mrf.mxu0
  %1373 = vdwg.mxu0
  %v1374 = vadd.f32 %v1331, %v1345
  %v1375 = vxor.u32 %v1374, 2147483648
  %v1376 = vmul.f32 %v1375, 1.442695
  %v1377 = vpow.pop %v1376
  %v1378 = vadd.f32 %v1377, 1.0
  %v1379 = vrcp.pop %v1378
  %v1380 = vmul.f32 %v1378, %v1379
  %v1381 = vsub.f32 1.0, %v1380
  %v1382 = vmul.f32 %v1379, %v1381
  %v1383 = vadd.f32 %v1379, %v1382
  %vm1384 = vweird.f32 %v1378
  %vm1385 = vweird.f32 %v1379
  %vm1386 = vmor %vm1384, %vm1385
  %v1387 = vsel %vm1386, %v1379, %v1383
  %v1388 = vand.u32 2147483647, %v1378
  %vm1389 = vcmp.eq.f32.partialorder %v1388, 8.507059e+37
  %v1390 = vand.u32 %v1378, 2147483648
  %v1391 = vor.u32 1.1754944e-38, %v1390
  %v1392 = vsel %vm1389, %v1391, %v1387
  %v1393 = vmul.f32 1.0, %v1392
  %v1394 = vadd.f32 %v1332, %v1358
  %v1395 = vxor.u32 %v1394, 2147483648
  %v1396 = vmul.f32 %v1395, 1.442695
  %v1397 = vpow.pop %v1396
  %v1398 = vadd.f32 %v1397, 1.0
  %v1399 = vrcp.pop %v1398
  %v1400 = vmul.f32 %v1398, %v1399
  %v1401 = vsub.f32 1.0, %v1400
  %v1402 = vmul.f32 %v1399, %v1401
  %v1403 = vadd.f32 %v1399, %v1402
  %vm1404 = vweird.f32 %v1398
  %vm1405 = vweird.f32 %v1399
  %vm1406 = vmor %vm1404, %vm1405
  %v1407 = vsel %vm1406, %v1399, %v1403
  %v1408 = vand.u32 2147483647, %v1398
  %vm1409 = vcmp.eq.f32.partialorder %v1408, 8.507059e+37
  %v1410 = vand.u32 %v1398, 2147483648
  %v1411 = vor.u32 1.1754944e-38, %v1410
  %v1412 = vsel %vm1409, %v1411, %v1407
  %v1413 = vmul.f32 1.0, %v1412
  %v1414 = vmul.f32 %v1393, %v1371
  %v1415 = vadd.f32 %v1333, %v1414
  %v1416 = vtanh.pop %v1415
  %v1417 = vsub.f32 1.0, %v1413
  %v1418 = vmul.f32 %v1417, %v1416
  %v1419 = vmul.f32 %v1413, %v1327
  %v1420 = vadd.f32 %v1418, %v1419
  %s1421 = scalar_lea.vmem %s14, 56
  %1422 = vst [vmem:[%s1421] sm:$0xff] %v1420
  %1423 = vst [vmem:[%s15] sm:$0xff] %v1420
  %v1424 = vld [vmem:[%s14] sm:$0xff]
  %v1425 = vld [vmem:[%s14 + $0x8] sm:$0xff]
  %v1426 = vld [vmem:[%s14 + $0x10] sm:$0xff]
  %v1427 = vld [vmem:[%s14 + $0x18] sm:$0xff]
  %v1428 = vld [vmem:[%s14 + $0x20] sm:$0xff]
  %v1429 = vld [vmem:[%s14 + $0x28] sm:$0xff]
  %v1430 = vld [vmem:[%s14 + $0x30] sm:$0xff]
  %v1431 = vld [vmem:[%s14 + $0x38] sm:$0xff]
  %v1432 = vpack.c.bf16 %v1425, %v1424
  %v1433 = vpack.c.bf16 %v1427, %v1426
  %v1434 = vpack.c.bf16 %v1429, %v1428
  %v1435 = vpack.c.bf16 %v1431, %v1430
  %v1436 = vld [vmem:[%s10] sm:$0xf]
  %v1437 = vld [vmem:[%s10 + $0x4] sm:$0xf]
  %v1438 = vld [vmem:[%s10 + $0x8] sm:$0xf]
  %v1439 = vld [vmem:[%s10 + $0xc] sm:$0xf]
  %v1440 = vld [vmem:[%s10 + $0x10] sm:$0xf]
  %v1441 = vld [vmem:[%s10 + $0x14] sm:$0xf]
  %v1442 = vld [vmem:[%s10 + $0x18] sm:$0xf]
  %v1443 = vld [vmem:[%s10 + $0x1c] sm:$0xf]
  %v1444 = vld [vmem:[%s10 + $0x20] sm:$0xf]
  %v1445 = vld [vmem:[%s10 + $0x24] sm:$0xf]
  %v1446 = vld [vmem:[%s10 + $0x28] sm:$0xf]
  %v1447 = vld [vmem:[%s10 + $0x2c] sm:$0xf]
  %v1448 = vld [vmem:[%s10 + $0x30] sm:$0xf]
  %v1449 = vld [vmem:[%s10 + $0x34] sm:$0xf]
  %v1450 = vld [vmem:[%s10 + $0x38] sm:$0xf]
  %v1451 = vld [vmem:[%s10 + $0x3c] sm:$0xf]
  %v1452 = vld [vmem:[%s11] sm:$0x1]
  %v1454 = vperm.slane %v1452, 0
  %v1472 = vunpack.c.l.b16 %v1436
  %v1473 = vunpack.c.l.b16 %v1437
  %v1474 = vunpack.c.l.b16 %v1438
  %v1475 = vunpack.c.l.b16 %v1439
  %v1476 = vunpack.c.l.b16 %v1440
  %v1477 = vunpack.c.l.b16 %v1441
  %v1478 = vunpack.c.l.b16 %v1442
  %v1479 = vunpack.c.l.b16 %v1443
  %v1480 = vunpack.c.l.b16 %v1444
  %v1481 = vunpack.c.l.b16 %v1445
  %v1482 = vunpack.c.l.b16 %v1446
  %v1483 = vunpack.c.l.b16 %v1447
  %v1484 = vunpack.c.l.b16 %v1448
  %v1485 = vunpack.c.l.b16 %v1449
  %v1486 = vunpack.c.l.b16 %v1450
  %v1487 = vunpack.c.l.b16 %v1451
  %v1488 = vpack.c.b16 %v1473, %v1472
  %v1489 = vpack.c.b16 %v1475, %v1474
  %v1490 = vpack.c.b16 %v1477, %v1476
  %v1491 = vpack.c.b16 %v1479, %v1478
  %v1492 = vpack.c.b16 %v1481, %v1480
  %v1493 = vpack.c.b16 %v1483, %v1482
  %v1494 = vpack.c.b16 %v1485, %v1484
  %v1495 = vpack.c.b16 %v1487, %v1486
  %1504 = vmatpush.bf16.msra.mxu0 %v1495
  %1505 = vmatpush.bf16.msra.mxu0 %v1494
  %1506 = vmatpush.bf16.msra.mxu0 %v1493
  %1507 = vmatpush.bf16.msra.mxu0 %v1492
  %1508 = vmatpush.bf16.msra.mxu0 %v1491
  %1509 = vmatpush.bf16.msra.mxu0 %v1490
  %1510 = vmatpush.bf16.msra.mxu0 %v1489
  %1511 = vmatpush.bf16.msra.mxu0 %v1488
  %1512 = vmatmul.bf16.gmra.mxu0 %v1432
  %v1513 = vpop.f32.mrf.mxu0
  %v1514 = vadd.f32 %v1454, %v1513
  %v1515 = vpop.f32.mrf.mxu0
  %v1516 = vadd.f32 %v1454, %v1515
  %1517 = vmatmul.bf16.gmra.mxu0 %v1433
  %v1518 = vpop.f32.mrf.mxu0
  %v1519 = vadd.f32 %v1454, %v1518
  %v1520 = vpop.f32.mrf.mxu0
  %v1521 = vadd.f32 %v1454, %v1520
  %1522 = vmatmul.bf16.gmra.mxu0 %v1434
  %v1523 = vpop.f32.mrf.mxu0
  %v1524 = vadd.f32 %v1454, %v1523
  %v1525 = vpop.f32.mrf.mxu0
  %v1526 = vadd.f32 %v1454, %v1525
  %1527 = vmatmul.bf16.gmra.mxu0 %v1435
  %v1528 = vpop.f32.mrf.mxu0
  %v1529 = vadd.f32 %v1454, %v1528
  %v1530 = vpop.f32.mrf.mxu0
  %v1531 = vadd.f32 %v1454, %v1530
  %1532 = vdwg.mxu0
  %1533 = vmax.xlane.f32.xlu0 %v1514
  %v1534 = vpop.xlane.xlu0 %1533
  %1535 = vmax.xlane.f32.xlu0 %v1516
  %v1536 = vpop.xlane.xlu0 %1535
  %1537 = vmax.xlane.f32.xlu0 %v1519
  %v1538 = vpop.xlane.xlu0 %1537
  %1539 = vmax.xlane.f32.xlu0 %v1521
  %v1540 = vpop.xlane.xlu0 %1539
  %1541 = vmax.xlane.f32.xlu0 %v1524
  %v1542 = vpop.xlane.xlu0 %1541
  %1543 = vmax.xlane.f32.xlu0 %v1526
  %v1544 = vpop.xlane.xlu0 %1543
  %1545 = vmax.xlane.f32.xlu0 %v1529
  %v1546 = vpop.xlane.xlu0 %1545
  %1547 = vmax.xlane.f32.xlu0 %v1531
  %v1548 = vpop.xlane.xlu0 %1547
  %v1549 = vsub.f32 %v1514, %v1534
  %v1550 = vsub.f32 %v1516, %v1536
  %v1551 = vsub.f32 %v1519, %v1538
  %v1552 = vsub.f32 %v1521, %v1540
  %v1553 = vsub.f32 %v1524, %v1542
  %v1554 = vsub.f32 %v1526, %v1544
  %v1555 = vsub.f32 %v1529, %v1546
  %v1556 = vsub.f32 %v1531, %v1548
  %v1557 = vmul.f32 %v1549, 1.442695
  %v1558 = vpow.pop %v1557
  %v1559 = vmul.f32 %v1550, 1.442695
  %v1560 = vpow.pop %v1559
  %v1561 = vmul.f32 %v1551, 1.442695
  %v1562 = vpow.pop %v1561
  %v1563 = vmul.f32 %v1552, 1.442695
  %v1564 = vpow.pop %v1563
  %v1565 = vmul.f32 %v1553, 1.442695
  %v1566 = vpow.pop %v1565
  %v1567 = vmul.f32 %v1554, 1.442695
  %v1568 = vpow.pop %v1567
  %v1569 = vmul.f32 %v1555, 1.442695
  %v1570 = vpow.pop %v1569
  %v1571 = vmul.f32 %v1556, 1.442695
  %v1572 = vpow.pop %v1571
  %1573 = vadd.xlane.f32.xlu0 %v1558
  %v1574 = vpop.xlane.xlu0 %1573
  %1575 = vadd.xlane.f32.xlu0 %v1560
  %v1576 = vpop.xlane.xlu0 %1575
  %1577 = vadd.xlane.f32.xlu0 %v1562
  %v1578 = vpop.xlane.xlu0 %1577
  %1579 = vadd.xlane.f32.xlu0 %v1564
  %v1580 = vpop.xlane.xlu0 %1579
  %1581 = vadd.xlane.f32.xlu0 %v1566
  %v1582 = vpop.xlane.xlu0 %1581
  %1583 = vadd.xlane.f32.xlu0 %v1568
  %v1584 = vpop.xlane.xlu0 %1583
  %1585 = vadd.xlane.f32.xlu0 %v1570
  %v1586 = vpop.xlane.xlu0 %1585
  %1587 = vadd.xlane.f32.xlu0 %v1572
  %v1588 = vpop.xlane.xlu0 %1587
  %v1589 = vlog2.pop %v1574
  %v1590 = vmul.f32 %v1589, 0.6931472
  %v1591 = vlog2.pop %v1576
  %v1592 = vmul.f32 %v1591, 0.6931472
  %v1593 = vlog2.pop %v1578
  %v1594 = vmul.f32 %v1593, 0.6931472
  %v1595 = vlog2.pop %v1580
  %v1596 = vmul.f32 %v1595, 0.6931472
  %v1597 = vlog2.pop %v1582
  %v1598 = vmul.f32 %v1597, 0.6931472
  %v1599 = vlog2.pop %v1584
  %v1600 = vmul.f32 %v1599, 0.6931472
  %v1601 = vlog2.pop %v1586
  %v1602 = vmul.f32 %v1601, 0.6931472
  %v1603 = vlog2.pop %v1588
  %v1604 = vmul.f32 %v1603, 0.6931472
  %v1605 = vadd.f32 %v1534, %v1590
  %v1606 = vadd.f32 %v1536, %v1592
  %v1607 = vadd.f32 %v1538, %v1594
  %v1608 = vadd.f32 %v1540, %v1596
  %v1609 = vadd.f32 %v1542, %v1598
  %v1610 = vadd.f32 %v1544, %v1600
  %v1611 = vadd.f32 %v1546, %v1602
  %v1612 = vadd.f32 %v1548, %v1604
  %1613 = vst [vmem:[%s12] sm:$0xff] %v1514
  %1614 = vst [vmem:[%s12 + $0x8] sm:$0xff] %v1516
  %1615 = vst [vmem:[%s12 + $0x10] sm:$0xff] %v1519
  %1616 = vst [vmem:[%s12 + $0x18] sm:$0xff] %v1521
  %1617 = vst [vmem:[%s12 + $0x20] sm:$0xff] %v1524
  %1618 = vst [vmem:[%s12 + $0x28] sm:$0xff] %v1526
  %1619 = vst [vmem:[%s12 + $0x30] sm:$0xff] %v1529
  %1620 = vst [vmem:[%s12 + $0x38] sm:$0xff] %v1531
  %vm1621 = vcmask 7168
  %1622 = vst.msk [vmem:[%s13] sm:$0xff] %vm1621, %v1605
  %1623 = vst.msk [vmem:[%s13 + $0x8] sm:$0xff] %vm1621, %v1606
  %1624 = vst.msk [vmem:[%s13 + $0x10] sm:$0xff] %vm1621, %v1607
  %1625 = vst.msk [vmem:[%s13 + $0x18] sm:$0xff] %vm1621, %v1608
  %1626 = vst.msk [vmem:[%s13 + $0x20] sm:$0xff] %vm1621, %v1609
  %1627 = vst.msk [vmem:[%s13 + $0x28] sm:$0xff] %vm1621, %v1610
  %1628 = vst.msk [vmem:[%s13 + $0x30] sm:$0xff] %vm1621, %v1611
  %1629 = vst.msk [vmem:[%s13 + $0x38] sm:$0xff] %vm1621, %v1612
  // Predicated region
  $region50: #{rnn_categorical_policy_forward.1} parent=0 // pred_check
    _
  $region51: #{rnn_categorical_policy_forward.1} parent=0 // pred_check_branch
    %1631 = sbr.rel (0) target = $region53
  $region52: #{rnn_categorical_policy_forward.1} parent=0 // pred_region
    _
  $region53: #{rnn_categorical_policy_forward.1} parent=0 // pred_fallthru
    _
  // Predicated region
  $region54: #{rnn_categorical_policy_forward.1} parent=0 // pred_check
    _
  $region55: #{rnn_categorical_policy_forward.1} parent=0 // pred_check_branch
    %1633 = sbr.rel (0) target = $region57
  $region56: #{rnn_categorical_policy_forward.1} parent=0 // pred_region
    _
  $region57: #{rnn_categorical_policy_forward.1} parent=0 // pred_fallthru
    _
  // Predicated region
  $region58: #{rnn_categorical_policy_forward.1} parent=0 // pred_check
    _
  $region59: #{rnn_categorical_policy_forward.1} parent=0 // pred_check_branch
    %1635 = sbr.rel (0) target = $region61
  $region60: #{rnn_categorical_policy_forward.1} parent=0 // pred_region
    _
  $region61: #{rnn_categorical_policy_forward.1} parent=0 // pred_fallthru
    _
  // Predicated region
  $region62: #{rnn_categorical_policy_forward.1} parent=0 // pred_check
    _
  $region63: #{rnn_categorical_policy_forward.1} parent=0 // pred_check_branch
    %1637 = sbr.rel (0) target = $region65
  $region64: #{rnn_categorical_policy_forward.1} parent=0 // pred_region
    _
  $region65: #{rnn_categorical_policy_forward.1} parent=0 // pred_fallthru
    _
  // Predicated region
  $region66: #{rnn_categorical_policy_forward.1} parent=0 // pred_check
    _
  $region67: #{rnn_categorical_policy_forward.1} parent=0 // pred_check_branch
    %1639 = sbr.rel (0) target = $region69
  $region68: #{rnn_categorical_policy_forward.1} parent=0 // pred_region
    _
  $region69: #{rnn_categorical_policy_forward.1} parent=0 // pred_fallthru
    _
  // Predicated region
  $region70: #{rnn_categorical_policy_forward.1} parent=0 // pred_check
    _
  $region71: #{rnn_categorical_policy_forward.1} parent=0 // pred_check_branch
    %1641 = sbr.rel (0) target = $region73
  $region72: #{rnn_categorical_policy_forward.1} parent=0 // pred_region
    _
  $region73: #{rnn_categorical_policy_forward.1} parent=0 // pred_fallthru
    _
  // Predicated region
  $region74: #{rnn_categorical_policy_forward.1} parent=0 // pred_check
    _
  $region75: #{rnn_categorical_policy_forward.1} parent=0 // pred_check_branch
    %1643 = sbr.rel (0) target = $region77
  $region76: #{rnn_categorical_policy_forward.1} parent=0 // pred_region
    _
  $region77: #{rnn_categorical_policy_forward.1} parent=0 // pred_fallthru
    _
  // Predicated region
  $region78: #{rnn_categorical_policy_forward.1} parent=0 // pred_check
    _
  $region79: #{rnn_categorical_policy_forward.1} parent=0 // pred_check_branch
    %1645 = sbr.rel (0) target = $region81
  $region80: #{rnn_categorical_policy_forward.1} parent=0 // pred_region
    _
  $region81: #{rnn_categorical_policy_forward.1} parent=0 // pred_fallthru
    _

</llo_original>
